<compile_context>
chip_gen: v7x
topology: tpu7x:2x2x1
jax: 0.10.0
libtpu: 0.0.40
codegen_flags: <defaults>
</compile_context>

<pallas_src>
import math

import jax
import jax.numpy as jnp
import numpy as np
from jax.experimental import pallas as pl
from jax.experimental.pallas import tpu as pltpu


def se_attention_kernel(x_ref, w1_ref, w2_ref, o_ref):
    """Fused SE block for one batch element.

    x_ref  : (1, C, HW)   activation, spatial flattened onto the lane axis
    w1_ref : (C, C//r)    squeeze weight  (== PyTorch fc[0].weight.T)
    w2_ref : (C//r, C)    excite weight   (== PyTorch fc[2].weight.T)
    o_ref  : (1, C, HW)
    """
    x = x_ref[...]                                    # (1, C, HW) f32, VMEM-resident
    hw = x.shape[2]

    # Global average pool over spatial (cross-lane reduce on the XLU).
    pooled = jnp.sum(x, axis=2) * (1.0 / hw)          # (1, C)

    # Squeeze -> ReLU -> Excite -> Sigmoid. MXU matmuls, default precision, f32 accum.
    h = jnp.dot(pooled, w1_ref[...], preferred_element_type=jnp.float32)   # (1, C//r)
    h = jnp.maximum(h, 0.0)
    s = jnp.dot(h, w2_ref[...], preferred_element_type=jnp.float32)        # (1, C)
    s = 1.0 / (1.0 + jnp.exp(-s))                     # sigmoid (exp on the EUP)

    # Channel-wise rescale of the resident activation (broadcast s along the lane axis).
    o_ref[...] = (x * s[:, :, None]).astype(o_ref.dtype)


def se_attention(x, w1, w2):
    """SEAttention.forward.  x: (B, C, *spatial) channels-first -> same shape."""
    b, c = x.shape[0], x.shape[1]
    hw = int(math.prod(x.shape[2:]))
    c_mid = w1.shape[1]
    x3 = x.reshape(b, c, hw)                          # free reshape, no transpose/copy

    # Advisory cost: pool + rescale elementwise work + the two tiny matmuls.
    flops = 2 * b * c * hw + 4 * b * c * c_mid
    bytes_accessed = 4 * (2 * b * c * hw + 2 * c * c_mid)

    out = pl.pallas_call(
        se_attention_kernel,
        out_shape=jax.ShapeDtypeStruct((b, c, hw), x.dtype),
        grid=(b,),
        in_specs=[
            pl.BlockSpec((1, c, hw), lambda i: (i, 0, 0)),
            pl.BlockSpec((c, c_mid), lambda i: (0, 0)),
            pl.BlockSpec((c_mid, c), lambda i: (0, 0)),
        ],
        out_specs=pl.BlockSpec((1, c, hw), lambda i: (i, 0, 0)),
        compiler_params=pltpu.CompilerParams(
            dimension_semantics=("parallel",)),
        cost_estimate=pl.CostEstimate(
            flops=flops, transcendentals=b * c, bytes_accessed=bytes_accessed),
    )(x3, w1, w2)
    return out.reshape(x.shape)


def reference_forward(x, w1, w2):
    """Pure-JAX reference of SEAttention.forward (for correctness checking)."""
    b, c = x.shape[0], x.shape[1]
    y = jnp.mean(x.reshape(b, c, -1), axis=-1)        # (b, c)  == AdaptiveAvgPool(1)
    y = jnp.maximum(jnp.dot(y, w1), 0.0)              # Linear(C->C//r, no bias) + ReLU
    y = 1.0 / (1.0 + jnp.exp(-jnp.dot(y, w2)))        # Linear(C//r->C, no bias) + Sigmoid
    return x * y.reshape((b, c) + (1,) * (x.ndim - 2))


if __name__ == "__main__":
    # Small shapes consistent with the module defaults:
    #   batch=2, channel=512 (module default), reduction=16 -> hidden=32, spatial=16x16.
    B, C, H, W = 2, 512, 16, 16
    REDUCTION = 16
    C_MID = C // REDUCTION

    key = jax.random.PRNGKey(0)
    kx, k1, k2 = jax.random.split(key, 3)
    x = jax.random.normal(kx, (B, C, H, W), jnp.float32)
    # Weights stored as (in_features, out_features) == PyTorch Linear weight transposed.
    w1 = jax.random.normal(k1, (C, C_MID), jnp.float32) * (1.0 / np.sqrt(C))
    w2 = jax.random.normal(k2, (C_MID, C), jnp.float32) * (1.0 / np.sqrt(C_MID))

    out = jax.block_until_ready(se_attention(x, w1, w2))
    assert out.shape == (B, C, H, W), out.shape

    ref = jax.block_until_ready(reference_forward(x, w1, w2))
    np.testing.assert_allclose(np.asarray(out), np.asarray(ref), rtol=1e-2, atol=1e-2)

    print("KERNEL_OK")
</pallas_src>

<mosaic_0001>
module attributes {stable_mosaic.version = 11 : i64} {
  func.func @se_attention_kernel(%arg0: i32, %arg1: memref<1x512x256xf32, #tpu.memory_space<vmem>>, %arg2: memref<512x32xf32, #tpu.memory_space<vmem>>, %arg3: memref<32x512xf32, #tpu.memory_space<vmem>>, %arg4: memref<1x512x256xf32, #tpu.memory_space<vmem>>) attributes {dimension_semantics = [#tpu.dimension_semantics<parallel>], iteration_bounds = array<i64: 2>, scalar_prefetch = 0 : i64, scratch_operands = 0 : i64, tpu.core_type = #tpu.core_type<tc>, window_params = [{transform_indices = @transform_0, window_bounds = array<i64: 1, 512, 256>}, {pipeline_mode = #tpu.pipeline_mode<synchronous>, transform_indices = @transform_1, window_bounds = array<i64: 512, 32>}, {pipeline_mode = #tpu.pipeline_mode<synchronous>, transform_indices = @transform_2, window_bounds = array<i64: 32, 512>}, {transform_indices = @transform_3, window_bounds = array<i64: 1, 512, 256>}]} {
    %c0 = arith.constant 0 : index
    %c0_0 = arith.constant 0 : index
    %c0_1 = arith.constant 0 : index
    %0 = vector.load %arg1[%c0, %c0_0, %c0_1] : memref<1x512x256xf32, #tpu.memory_space<vmem>>, vector<1x512x256xf32>
    %cst = arith.constant dense<0.000000e+00> : vector<1x512xf32>
    %1 = vector.multi_reduction <add>, %0, %cst [2] : vector<1x512x256xf32> to vector<1x512xf32>
    %cst_2 = arith.constant 3.906250e-03 : f32
    %2 = vector.broadcast %cst_2 : f32 to vector<1x512xf32>
    %3 = arith.mulf %1, %2 : vector<1x512xf32>
    %c0_3 = arith.constant 0 : index
    %c0_4 = arith.constant 0 : index
    %4 = vector.load %arg2[%c0_3, %c0_4] : memref<512x32xf32, #tpu.memory_space<vmem>>, vector<512x32xf32>
    %cst_5 = arith.constant dense<0.000000e+00> : vector<1x32xf32>
    %5 = tpu.matmul %3, %4, %cst_5 {dimension_numbers = #tpu.dot_dimension_numbers<[1], [0], [0], [1], [0, 0, 1, 1], [], []>} : vector<1x512xf32>, vector<512x32xf32>, vector<1x32xf32> -> vector<1x32xf32>
    %cst_6 = arith.constant 0.000000e+00 : f32
    %6 = vector.broadcast %cst_6 : f32 to vector<1x32xf32>
    %7 = arith.maximumf %5, %6 : vector<1x32xf32>
    %c0_7 = arith.constant 0 : index
    %c0_8 = arith.constant 0 : index
    %8 = vector.load %arg3[%c0_7, %c0_8] : memref<32x512xf32, #tpu.memory_space<vmem>>, vector<32x512xf32>
    %cst_9 = arith.constant dense<0.000000e+00> : vector<1x512xf32>
    %9 = tpu.matmul %7, %8, %cst_9 {dimension_numbers = #tpu.dot_dimension_numbers<[1], [0], [0], [1], [0, 0, 1, 1], [], []>} : vector<1x32xf32>, vector<32x512xf32>, vector<1x512xf32> -> vector<1x512xf32>
    %cst_10 = arith.constant 0.000000e+00 : f32
    %10 = vector.broadcast %cst_10 : f32 to vector<1x512xf32>
    %11 = arith.subf %10, %9 : vector<1x512xf32>
    %12 = math.exp %11 : vector<1x512xf32>
    %cst_11 = arith.constant 1.000000e+00 : f32
    %13 = vector.broadcast %cst_11 : f32 to vector<1x512xf32>
    %14 = arith.addf %13, %12 : vector<1x512xf32>
    %cst_12 = arith.constant 1.000000e+00 : f32
    %15 = vector.broadcast %cst_12 : f32 to vector<1x512xf32>
    %16 = arith.divf %15, %14 : vector<1x512xf32>
    %17 = vector.shape_cast %16 : vector<1x512xf32> to vector<1x512x1xf32>
    %18 = vector.broadcast %17 : vector<1x512x1xf32> to vector<1x512x256xf32>
    %19 = arith.mulf %0, %18 : vector<1x512x256xf32>
    %c0_13 = arith.constant 0 : index
    %c0_14 = arith.constant 0 : index
    %c0_15 = arith.constant 0 : index
    %20 = vector.load %arg4[%c0_13, %c0_14, %c0_15] : memref<1x512x256xf32, #tpu.memory_space<vmem>>, vector<1x512x256xf32>
    tpu.vector_store %arg4[%c0_13, %c0_14, %c0_15], %19 {strides = array<i32>} : memref<1x512x256xf32, #tpu.memory_space<vmem>>, vector<1x512x256xf32>,
    return
  }
  func.func @transform_0(%arg0: i32) -> (i32, i32, i32) {
    %c0_i32 = arith.constant 0 : i32
    %c0_i32_0 = arith.constant 0 : i32
    %c0_i32_1 = arith.constant 0 : i32
    return %arg0, %c0_i32, %c0_i32_0 : i32, i32, i32
  }
  func.func @transform_1(%arg0: i32) -> (i32, i32) {
    %c0_i32 = arith.constant 0 : i32
    %c0_i32_0 = arith.constant 0 : i32
    %c0_i32_1 = arith.constant 0 : i32
    return %c0_i32, %c0_i32_0 : i32, i32
  }
  func.func @transform_2(%arg0: i32) -> (i32, i32) {
    %c0_i32 = arith.constant 0 : i32
    %c0_i32_0 = arith.constant 0 : i32
    %c0_i32_1 = arith.constant 0 : i32
    return %c0_i32, %c0_i32_0 : i32, i32
  }
  func.func @transform_3(%arg0: i32) -> (i32, i32, i32) {
    %c0_i32 = arith.constant 0 : i32
    %c0_i32_0 = arith.constant 0 : i32
    %c0_i32_1 = arith.constant 0 : i32
    return %arg0, %c0_i32, %c0_i32_0 : i32, i32, i32
  }
}

</mosaic_0001>

<llo_original>
// kernel: tpu_custom_call.1
$region0: #{tpu_custom_call.1}
  #allocation0 [shape = 'u32[]', space=smem, size = 0x4, offset = 0x4, fixed_abs, tag = 'smem constant byte address 0x4 - core index']
  #allocation1 [shape = 'u32[144,128]{1,0:T(1,128)}', space=vmem, size = 0x12000, scoped, tag = 'internal scratch']
  %s0 = inlined_call_operand.hbm [shape: f32[2,512,256], index: 0, kind: input, shape index: {}]
  %s1 = inlined_call_operand.vmem [shape: f32[512,32], index: 1, kind: input, shape index: {}]
  %s2 = inlined_call_operand.vmem [shape: f32[32,512], index: 2, kind: input, shape index: {}]
  %s3 = inlined_call_operand.hbm [shape: f32[2,512,256], index: 3, kind: output, shape index: {}]
  %s4 = sld [smem:[#allocation0]]
  $region49: #{tpu_custom_call.1} parent=0
    _
  %s6 = ssub.s32 1, %s4
  %s7 = scalar_select 0, %s6, %s4
  $region1: #{tpu_custom_call.1} parent=0
    #allocation2 [shape = 'u8[1048576]{0}', space=vmem, size = 0x100000, scoped, tag = 'input window, operand 0']
    #allocation3 [shape = 's32[2]{0}', space=sflag, size = 0x8, scoped, tag = 'scoped memory for tpu_custom_call.1']
    #allocation4 [shape = 's32[2]{0}', space=sflag, size = 0x8, scoped, tag = 'scoped memory for tpu_custom_call.1']
    #allocation5 [shape = 'u8[1048576]{0}', space=vmem, size = 0x100000, scoped, tag = 'output window, operand 0']
    %8 = vsyncpa [#allocation3], 0
    %s9 = scalar_lea.sflag [#allocation3], 1
    %10 = vsyncpa %s9, 0
    %11 = vsyncpa [#allocation4], 0
    %s12 = scalar_lea.sflag [#allocation4], 1
    %13 = vsyncpa %s12, 0
    loop: start=0, step=1, limit=4
    $region2: #{tpu_custom_call.1} parent=1 // loop_pre_header
      _
    $region3: #{tpu_custom_call.1} parent=1 // loop_header
      %s15 = sphi 0, %s19
      %p16 = scmp.ge.s32.totalorder %s15, 4
      %s25 = sphi 0, %s27
      %s28 = sphi 0, %s25
      %s29 = sphi 0, %s28
      %s45 = sphi 0, %s29
      %s49 = sphi 0, %s49
      %s51 = sphi 0, %s49
      %s52 = sphi 0, %s51
      %s66 = sphi 0, %s52
      %s70 = sphi 0, %s70
      %s72 = sphi 0, %s70
      %s73 = sphi 0, %s72
      %s87 = sphi 0, %s73
      %s93 = sphi 0, %s95
      %s96 = sphi 0, %s93
      %s97 = sphi 0, %s96
      %s113 = sphi 0, %s97
    $region4: #{tpu_custom_call.1} parent=1 // loop_header_branch
      %18 = sbr.rel (%p16) target = $region8
    $region5: #{tpu_custom_call.1} parent=1 // loop_body
      %s20 = ssub.s32 %s15, 1
      %s21 = ssub.s32 %s15, 2
      %s22 = sadd.s32 %s15, 1
      %s23 = ssub.s32 %s15, %s22
      %p24 = scmp.eq.s32.totalorder %s23, 0
      %s26 = sadd.s32 %s25, 1
      %s27 = scalar_select %p24, %s25, %s26
      %p30 = pneg %p24
      %p31 = scmp.eq.s32.totalorder %s15, 1
      %p32 = por %p30, %p31
      %p33 = scmp.ne.s32.totalorder %s25, %s28
      %p34 = scmp.eq.s32.totalorder %s15, 0
      %p35 = por %p33, %p34
      %p36 = scmp.ne.s32.totalorder %s25, %s28
      %p37 = scmp.eq.s32.totalorder %s20, 1
      %p38 = por %p36, %p37
      %p39 = scmp.ne.s32.totalorder %s28, %s29
      %p40 = scmp.eq.s32.totalorder %s20, 0
      %p41 = por %p39, %p40
      %p42 = scmp.ne.s32.totalorder %s28, %s29
      %p43 = scmp.eq.s32.totalorder %s21, 1
      %p44 = por %p42, %p43
      %p46 = scmp.ne.s32.totalorder %s29, %s45
      %p47 = scmp.eq.s32.totalorder %s21, 0
      %p48 = por %p46, %p47
      %s50 = sadd.s32 %s49, 1
      %p53 = scmp.eq.s32.totalorder %s15, 1
      %p54 = scmp.ne.s32.totalorder %s49, %s51
      %p55 = scmp.eq.s32.totalorder %s15, 0
      %p56 = por %p54, %p55
      %p57 = scmp.ne.s32.totalorder %s49, %s51
      %p58 = scmp.eq.s32.totalorder %s20, 1
      %p59 = por %p57, %p58
      %p60 = scmp.ne.s32.totalorder %s51, %s52
      %p61 = scmp.eq.s32.totalorder %s20, 0
      %p62 = por %p60, %p61
      %p63 = scmp.ne.s32.totalorder %s51, %s52
      %p64 = scmp.eq.s32.totalorder %s21, 1
      %p65 = por %p63, %p64
      %p67 = scmp.ne.s32.totalorder %s52, %s66
      %p68 = scmp.eq.s32.totalorder %s21, 0
      %p69 = por %p67, %p68
      %s71 = sadd.s32 %s70, 1
      %p74 = scmp.eq.s32.totalorder %s15, 1
      %p75 = scmp.ne.s32.totalorder %s70, %s72
      %p76 = scmp.eq.s32.totalorder %s15, 0
      %p77 = por %p75, %p76
      %p78 = scmp.ne.s32.totalorder %s70, %s72
      %p79 = scmp.eq.s32.totalorder %s20, 1
      %p80 = por %p78, %p79
      %p81 = scmp.ne.s32.totalorder %s72, %s73
      %p82 = scmp.eq.s32.totalorder %s20, 0
      %p83 = por %p81, %p82
      %p84 = scmp.ne.s32.totalorder %s72, %s73
      %p85 = scmp.eq.s32.totalorder %s21, 1
      %p86 = por %p84, %p85
      %p88 = scmp.ne.s32.totalorder %s73, %s87
      %p89 = scmp.eq.s32.totalorder %s21, 0
      %p90 = por %p88, %p89
      %s91 = ssub.s32 %s15, %s22
      %p92 = scmp.eq.s32.totalorder %s91, 0
      %s94 = sadd.s32 %s93, 1
      %s95 = scalar_select %p92, %s93, %s94
      %p98 = pneg %p92
      %p99 = scmp.eq.s32.totalorder %s15, 1
      %p100 = por %p98, %p99
      %p101 = scmp.ne.s32.totalorder %s93, %s96
      %p102 = scmp.eq.s32.totalorder %s15, 0
      %p103 = por %p101, %p102
      %p104 = scmp.ne.s32.totalorder %s93, %s96
      %p105 = scmp.eq.s32.totalorder %s20, 1
      %p106 = por %p104, %p105
      %p107 = scmp.ne.s32.totalorder %s96, %s97
      %p108 = scmp.eq.s32.totalorder %s20, 0
      %p109 = por %p107, %p108
      %p110 = scmp.ne.s32.totalorder %s96, %s97
      %p111 = scmp.eq.s32.totalorder %s21, 1
      %p112 = por %p110, %p111
      %p114 = scmp.ne.s32.totalorder %s97, %s113
      %p115 = scmp.eq.s32.totalorder %s21, 0
      %p116 = por %p114, %p115
      %p117 = scmp.le.s32.totalorder 1, %s15
      %p118 = scmp.lt.s32.totalorder %s15, 3
      %p119 = pnand %p117, %p118
      %p120 = pneg %p119
      // Predicated region
      $region9: #{tpu_custom_call.1} parent=5 // pred_check
        _
      $region10: #{tpu_custom_call.1} parent=5 // pred_check_branch
        %122 = sbr.rel (%p119) target = $region12
      $region11: #{tpu_custom_call.1} parent=5 // pred_region
        %s123 = ssub.s32 %s15, 1
        // Predicated region
        $region13: #{tpu_custom_call.1} parent=11 // pred_check
          %p124 = pneg %p62
        $region14: #{tpu_custom_call.1} parent=11 // pred_check_branch
          %126 = sbr.rel (%p124) target = $region16
        $region15: #{tpu_custom_call.1} parent=11 // pred_region
          _
        $region16: #{tpu_custom_call.1} parent=11 // pred_fallthru
          _
        // Predicated region
        $region17: #{tpu_custom_call.1} parent=11 // pred_check
          %p127 = pneg %p83
        $region18: #{tpu_custom_call.1} parent=11 // pred_check_branch
          %129 = sbr.rel (%p127) target = $region20
        $region19: #{tpu_custom_call.1} parent=11 // pred_region
          _
        $region20: #{tpu_custom_call.1} parent=11 // pred_fallthru
          _
      $region12: #{tpu_custom_call.1} parent=5 // pred_fallthru
        _
      %p130 = scmp.lt.s32.totalorder %s15, 2
      // Predicated region
      $region21: #{tpu_custom_call.1} parent=5 // pred_check
        %p131 = pneg %p130
      $region22: #{tpu_custom_call.1} parent=5 // pred_check_branch
        %133 = sbr.rel (%p131) target = $region24
      $region23: #{tpu_custom_call.1} parent=5 // pred_region
        // Predicated region
        $region25: #{tpu_custom_call.1} parent=23 // pred_check
          %p134 = pneg %p35
        $region26: #{tpu_custom_call.1} parent=23 // pred_check_branch
          %136 = sbr.rel (%p134) target = $region28
        $region27: #{tpu_custom_call.1} parent=23 // pred_region
          %s137 = sand.u32 %s25, 1
          %s138 = scalar_lea.sflag [#allocation3], %s137
          %s139 = sand.u32 %s25, 1
          %s140 = smul.addr %s139, 1024
          %s141 = scalar_lea.vmem [#allocation2], %s140
          %s143 = ssub.s32 16384, 16384
          %144 = vsyncadd %s138, %s143
          %s145 = smul.addr %s15, 128
          %s146 = smul.addr %s145, 128
          %s147 = scalar_lea.hbm %s0, %s146
          %s148 = sshll.u32 %s141, 4
          %s149 = int_to_ptr.vmem [resolvable:$true] %s148
          %154 = dma.hbm_to_vmem [thread:$0]  %s147, 16384, %s149, %s138, 256, 256, 16
        $region28: #{tpu_custom_call.1} parent=23 // pred_fallthru
          _
      $region24: #{tpu_custom_call.1} parent=5 // pred_fallthru
        _
      %p155 = scmp.le.s32.totalorder 1, %s15
      %p156 = scmp.lt.s32.totalorder %s15, 3
      %p157 = pnand %p155, %p156
      %p158 = pneg %p157
      // Predicated region
      $region29: #{tpu_custom_call.1} parent=5 // pred_check
        _
      $region30: #{tpu_custom_call.1} parent=5 // pred_check_branch
        %160 = sbr.rel (%p157) target = $region32
      $region31: #{tpu_custom_call.1} parent=5 // pred_region
        %s161 = ssub.s32 %s15, 1
        %s162 = sand.u32 %s28, 1
        %s163 = scalar_lea.sflag [#allocation3], %s162
        %s164 = sand.u32 %s28, 1
        %s165 = smul.addr %s164, 1024
        %s166 = scalar_lea.vmem [#allocation2], %s165
        // Predicated region
        $region33: #{tpu_custom_call.1} parent=31 // pred_check
          %p167 = pneg %p41
        $region34: #{tpu_custom_call.1} parent=31 // pred_check_branch
          %169 = sbr.rel (%p167) target = $region36
        $region35: #{tpu_custom_call.1} parent=31 // pred_region
          %170 = dma.done %s163, 16384
        $region36: #{tpu_custom_call.1} parent=31 // pred_fallthru
          _
        %s171 = sand.u32 %s28, 1
        %s172 = scalar_lea.sflag [#allocation3], %s171
        %s173 = sand.u32 %s28, 1
        %s174 = smul.addr %s173, 1024
        %s175 = scalar_lea.vmem [#allocation2], %s174
        %p176 = pneg %p41
        %p177 = pneg %p38
        %p178 = pneg %p62
        %p179 = pneg %p59
        %p180 = pneg %p83
        %p181 = pneg %p80
        %p182 = pneg %p109
        %p183 = pneg %p106
        %s184 = sand.u32 %s96, 1
        %s185 = scalar_lea.sflag [#allocation4], %s184
        %s186 = sand.u32 %s96, 1
        %s187 = smul.addr %s186, 1024
        %s188 = scalar_lea.vmem [#allocation5], %s187
        %v189 = vld [vmem:[%s166] sm:$0xff]
        %v190 = vld [vmem:[%s166 + $0x8] sm:$0xff]
        %v191 = vld [vmem:[%s166 + $0x10] sm:$0xff]
        %v192 = vld [vmem:[%s166 + $0x18] sm:$0xff]
        %v193 = vld [vmem:[%s166 + $0x20] sm:$0xff]
        %v194 = vld [vmem:[%s166 + $0x28] sm:$0xff]
        %v195 = vld [vmem:[%s166 + $0x30] sm:$0xff]
        %v196 = vld [vmem:[%s166 + $0x38] sm:$0xff]
        %v197 = vld [vmem:[%s166 + $0x40] sm:$0xff]
        %v198 = vld [vmem:[%s166 + $0x48] sm:$0xff]
        %v199 = vld [vmem:[%s166 + $0x50] sm:$0xff]
        %v200 = vld [vmem:[%s166 + $0x58] sm:$0xff]
        %v201 = vld [vmem:[%s166 + $0x60] sm:$0xff]
        %v202 = vld [vmem:[%s166 + $0x68] sm:$0xff]
        %v203 = vld [vmem:[%s166 + $0x70] sm:$0xff]
        %v204 = vld [vmem:[%s166 + $0x78] sm:$0xff]
        %v205 = vld [vmem:[%s166 + $0x80] sm:$0xff]
        %v206 = vld [vmem:[%s166 + $0x88] sm:$0xff]
        %v207 = vld [vmem:[%s166 + $0x90] sm:$0xff]
        %v208 = vld [vmem:[%s166 + $0x98] sm:$0xff]
        %v209 = vld [vmem:[%s166 + $0xa0] sm:$0xff]
        %v210 = vld [vmem:[%s166 + $0xa8] sm:$0xff]
        %v211 = vld [vmem:[%s166 + $0xb0] sm:$0xff]
        %v212 = vld [vmem:[%s166 + $0xb8] sm:$0xff]
        %v213 = vld [vmem:[%s166 + $0xc0] sm:$0xff]
        %v214 = vld [vmem:[%s166 + $0xc8] sm:$0xff]
        %v215 = vld [vmem:[%s166 + $0xd0] sm:$0xff]
        %v216 = vld [vmem:[%s166 + $0xd8] sm:$0xff]
        %v217 = vld [vmem:[%s166 + $0xe0] sm:$0xff]
        %v218 = vld [vmem:[%s166 + $0xe8] sm:$0xff]
        %v219 = vld [vmem:[%s166 + $0xf0] sm:$0xff]
        %v220 = vld [vmem:[%s166 + $0xf8] sm:$0xff]
        %v221 = vld [vmem:[%s166 + $0x100] sm:$0xff]
        %v222 = vld [vmem:[%s166 + $0x108] sm:$0xff]
        %v223 = vld [vmem:[%s166 + $0x110] sm:$0xff]
        %v224 = vld [vmem:[%s166 + $0x118] sm:$0xff]
        %v225 = vld [vmem:[%s166 + $0x120] sm:$0xff]
        %v226 = vld [vmem:[%s166 + $0x128] sm:$0xff]
        %v227 = vld [vmem:[%s166 + $0x130] sm:$0xff]
        %v228 = vld [vmem:[%s166 + $0x138] sm:$0xff]
        %v229 = vld [vmem:[%s166 + $0x140] sm:$0xff]
        %v230 = vld [vmem:[%s166 + $0x148] sm:$0xff]
        %v231 = vld [vmem:[%s166 + $0x150] sm:$0xff]
        %v232 = vld [vmem:[%s166 + $0x158] sm:$0xff]
        %v233 = vld [vmem:[%s166 + $0x160] sm:$0xff]
        %v234 = vld [vmem:[%s166 + $0x168] sm:$0xff]
        %v235 = vld [vmem:[%s166 + $0x170] sm:$0xff]
        %v236 = vld [vmem:[%s166 + $0x178] sm:$0xff]
        %v237 = vld [vmem:[%s166 + $0x180] sm:$0xff]
        %v238 = vld [vmem:[%s166 + $0x188] sm:$0xff]
        %v239 = vld [vmem:[%s166 + $0x190] sm:$0xff]
        %v240 = vld [vmem:[%s166 + $0x198] sm:$0xff]
        %v241 = vld [vmem:[%s166 + $0x1a0] sm:$0xff]
        %v242 = vld [vmem:[%s166 + $0x1a8] sm:$0xff]
        %v243 = vld [vmem:[%s166 + $0x1b0] sm:$0xff]
        %v244 = vld [vmem:[%s166 + $0x1b8] sm:$0xff]
        %v245 = vld [vmem:[%s166 + $0x1c0] sm:$0xff]
        %v246 = vld [vmem:[%s166 + $0x1c8] sm:$0xff]
        %v247 = vld [vmem:[%s166 + $0x1d0] sm:$0xff]
        %v248 = vld [vmem:[%s166 + $0x1d8] sm:$0xff]
        %v249 = vld [vmem:[%s166 + $0x1e0] sm:$0xff]
        %v250 = vld [vmem:[%s166 + $0x1e8] sm:$0xff]
        %v251 = vld [vmem:[%s166 + $0x1f0] sm:$0xff]
        %v252 = vld [vmem:[%s166 + $0x1f8] sm:$0xff]
        %v253 = vld [vmem:[%s166 + $0x200] sm:$0xff]
        %v254 = vld [vmem:[%s166 + $0x208] sm:$0xff]
        %v255 = vld [vmem:[%s166 + $0x210] sm:$0xff]
        %v256 = vld [vmem:[%s166 + $0x218] sm:$0xff]
        %v257 = vld [vmem:[%s166 + $0x220] sm:$0xff]
        %v258 = vld [vmem:[%s166 + $0x228] sm:$0xff]
        %v259 = vld [vmem:[%s166 + $0x230] sm:$0xff]
        %v260 = vld [vmem:[%s166 + $0x238] sm:$0xff]
        %v261 = vld [vmem:[%s166 + $0x240] sm:$0xff]
        %v262 = vld [vmem:[%s166 + $0x248] sm:$0xff]
        %v263 = vld [vmem:[%s166 + $0x250] sm:$0xff]
        %v264 = vld [vmem:[%s166 + $0x258] sm:$0xff]
        %v265 = vld [vmem:[%s166 + $0x260] sm:$0xff]
        %v266 = vld [vmem:[%s166 + $0x268] sm:$0xff]
        %v267 = vld [vmem:[%s166 + $0x270] sm:$0xff]
        %v268 = vld [vmem:[%s166 + $0x278] sm:$0xff]
        %v269 = vld [vmem:[%s166 + $0x280] sm:$0xff]
        %v270 = vld [vmem:[%s166 + $0x288] sm:$0xff]
        %v271 = vld [vmem:[%s166 + $0x290] sm:$0xff]
        %v272 = vld [vmem:[%s166 + $0x298] sm:$0xff]
        %v273 = vld [vmem:[%s166 + $0x2a0] sm:$0xff]
        %v274 = vld [vmem:[%s166 + $0x2a8] sm:$0xff]
        %v275 = vld [vmem:[%s166 + $0x2b0] sm:$0xff]
        %v276 = vld [vmem:[%s166 + $0x2b8] sm:$0xff]
        %v277 = vld [vmem:[%s166 + $0x2c0] sm:$0xff]
        %v278 = vld [vmem:[%s166 + $0x2c8] sm:$0xff]
        %v279 = vld [vmem:[%s166 + $0x2d0] sm:$0xff]
        %v280 = vld [vmem:[%s166 + $0x2d8] sm:$0xff]
        %v281 = vld [vmem:[%s166 + $0x2e0] sm:$0xff]
        %v282 = vld [vmem:[%s166 + $0x2e8] sm:$0xff]
        %v283 = vld [vmem:[%s166 + $0x2f0] sm:$0xff]
        %v284 = vld [vmem:[%s166 + $0x2f8] sm:$0xff]
        %v285 = vld [vmem:[%s166 + $0x300] sm:$0xff]
        %v286 = vld [vmem:[%s166 + $0x308] sm:$0xff]
        %v287 = vld [vmem:[%s166 + $0x310] sm:$0xff]
        %v288 = vld [vmem:[%s166 + $0x318] sm:$0xff]
        %v289 = vld [vmem:[%s166 + $0x320] sm:$0xff]
        %v290 = vld [vmem:[%s166 + $0x328] sm:$0xff]
        %v291 = vld [vmem:[%s166 + $0x330] sm:$0xff]
        %v292 = vld [vmem:[%s166 + $0x338] sm:$0xff]
        %v293 = vld [vmem:[%s166 + $0x340] sm:$0xff]
        %v294 = vld [vmem:[%s166 + $0x348] sm:$0xff]
        %v295 = vld [vmem:[%s166 + $0x350] sm:$0xff]
        %v296 = vld [vmem:[%s166 + $0x358] sm:$0xff]
        %v297 = vld [vmem:[%s166 + $0x360] sm:$0xff]
        %v298 = vld [vmem:[%s166 + $0x368] sm:$0xff]
        %v299 = vld [vmem:[%s166 + $0x370] sm:$0xff]
        %v300 = vld [vmem:[%s166 + $0x378] sm:$0xff]
        %v301 = vld [vmem:[%s166 + $0x380] sm:$0xff]
        %v302 = vld [vmem:[%s166 + $0x388] sm:$0xff]
        %v303 = vld [vmem:[%s166 + $0x390] sm:$0xff]
        %v304 = vld [vmem:[%s166 + $0x398] sm:$0xff]
        %v305 = vld [vmem:[%s166 + $0x3a0] sm:$0xff]
        %v306 = vld [vmem:[%s166 + $0x3a8] sm:$0xff]
        %v307 = vld [vmem:[%s166 + $0x3b0] sm:$0xff]
        %v308 = vld [vmem:[%s166 + $0x3b8] sm:$0xff]
        %v309 = vld [vmem:[%s166 + $0x3c0] sm:$0xff]
        %v310 = vld [vmem:[%s166 + $0x3c8] sm:$0xff]
        %v311 = vld [vmem:[%s166 + $0x3d0] sm:$0xff]
        %v312 = vld [vmem:[%s166 + $0x3d8] sm:$0xff]
        %v313 = vld [vmem:[%s166 + $0x3e0] sm:$0xff]
        %v314 = vld [vmem:[%s166 + $0x3e8] sm:$0xff]
        %v315 = vld [vmem:[%s166 + $0x3f0] sm:$0xff]
        %v316 = vld [vmem:[%s166 + $0x3f8] sm:$0xff]
        %v317 = vadd.f32 %v189, %v190
        %318 = vadd.xlane.f32.xlu0 %v317
        %v319 = vpop.xlane.xlu0 %318
        %v320 = vadd.f32 %v191, %v192
        %321 = vadd.xlane.f32.xlu0 %v320
        %v322 = vpop.xlane.xlu0 %321
        %v323 = vadd.f32 %v193, %v194
        %324 = vadd.xlane.f32.xlu0 %v323
        %v325 = vpop.xlane.xlu0 %324
        %v326 = vadd.f32 %v195, %v196
        %327 = vadd.xlane.f32.xlu0 %v326
        %v328 = vpop.xlane.xlu0 %327
        %v329 = vadd.f32 %v197, %v198
        %330 = vadd.xlane.f32.xlu0 %v329
        %v331 = vpop.xlane.xlu0 %330
        %v332 = vadd.f32 %v199, %v200
        %333 = vadd.xlane.f32.xlu0 %v332
        %v334 = vpop.xlane.xlu0 %333
        %v335 = vadd.f32 %v201, %v202
        %336 = vadd.xlane.f32.xlu0 %v335
        %v337 = vpop.xlane.xlu0 %336
        %v338 = vadd.f32 %v203, %v204
        %339 = vadd.xlane.f32.xlu0 %v338
        %v340 = vpop.xlane.xlu0 %339
        %v341 = vadd.f32 %v205, %v206
        %342 = vadd.xlane.f32.xlu0 %v341
        %v343 = vpop.xlane.xlu0 %342
        %v344 = vadd.f32 %v207, %v208
        %345 = vadd.xlane.f32.xlu0 %v344
        %v346 = vpop.xlane.xlu0 %345
        %v347 = vadd.f32 %v209, %v210
        %348 = vadd.xlane.f32.xlu0 %v347
        %v349 = vpop.xlane.xlu0 %348
        %v350 = vadd.f32 %v211, %v212
        %351 = vadd.xlane.f32.xlu0 %v350
        %v352 = vpop.xlane.xlu0 %351
        %v353 = vadd.f32 %v213, %v214
        %354 = vadd.xlane.f32.xlu0 %v353
        %v355 = vpop.xlane.xlu0 %354
        %v356 = vadd.f32 %v215, %v216
        %357 = vadd.xlane.f32.xlu0 %v356
        %v358 = vpop.xlane.xlu0 %357
        %v359 = vadd.f32 %v217, %v218
        %360 = vadd.xlane.f32.xlu0 %v359
        %v361 = vpop.xlane.xlu0 %360
        %v362 = vadd.f32 %v219, %v220
        %363 = vadd.xlane.f32.xlu0 %v362
        %v364 = vpop.xlane.xlu0 %363
        %v365 = vadd.f32 %v221, %v222
        %366 = vadd.xlane.f32.xlu0 %v365
        %v367 = vpop.xlane.xlu0 %366
        %v368 = vadd.f32 %v223, %v224
        %369 = vadd.xlane.f32.xlu0 %v368
        %v370 = vpop.xlane.xlu0 %369
        %v371 = vadd.f32 %v225, %v226
        %372 = vadd.xlane.f32.xlu0 %v371
        %v373 = vpop.xlane.xlu0 %372
        %v374 = vadd.f32 %v227, %v228
        %375 = vadd.xlane.f32.xlu0 %v374
        %v376 = vpop.xlane.xlu0 %375
        %v377 = vadd.f32 %v229, %v230
        %378 = vadd.xlane.f32.xlu0 %v377
        %v379 = vpop.xlane.xlu0 %378
        %v380 = vadd.f32 %v231, %v232
        %381 = vadd.xlane.f32.xlu0 %v380
        %v382 = vpop.xlane.xlu0 %381
        %v383 = vadd.f32 %v233, %v234
        %384 = vadd.xlane.f32.xlu0 %v383
        %v385 = vpop.xlane.xlu0 %384
        %v386 = vadd.f32 %v235, %v236
        %387 = vadd.xlane.f32.xlu0 %v386
        %v388 = vpop.xlane.xlu0 %387
        %v389 = vadd.f32 %v237, %v238
        %390 = vadd.xlane.f32.xlu0 %v389
        %v391 = vpop.xlane.xlu0 %390
        %v392 = vadd.f32 %v239, %v240
        %393 = vadd.xlane.f32.xlu0 %v392
        %v394 = vpop.xlane.xlu0 %393
        %v395 = vadd.f32 %v241, %v242
        %396 = vadd.xlane.f32.xlu0 %v395
        %v397 = vpop.xlane.xlu0 %396
        %v398 = vadd.f32 %v243, %v244
        %399 = vadd.xlane.f32.xlu0 %v398
        %v400 = vpop.xlane.xlu0 %399
        %v401 = vadd.f32 %v245, %v246
        %402 = vadd.xlane.f32.xlu0 %v401
        %v403 = vpop.xlane.xlu0 %402
        %v404 = vadd.f32 %v247, %v248
        %405 = vadd.xlane.f32.xlu0 %v404
        %v406 = vpop.xlane.xlu0 %405
        %v407 = vadd.f32 %v249, %v250
        %408 = vadd.xlane.f32.xlu0 %v407
        %v409 = vpop.xlane.xlu0 %408
        %v410 = vadd.f32 %v251, %v252
        %411 = vadd.xlane.f32.xlu0 %v410
        %v412 = vpop.xlane.xlu0 %411
        %v413 = vadd.f32 %v253, %v254
        %414 = vadd.xlane.f32.xlu0 %v413
        %v415 = vpop.xlane.xlu0 %414
        %v416 = vadd.f32 %v255, %v256
        %417 = vadd.xlane.f32.xlu0 %v416
        %v418 = vpop.xlane.xlu0 %417
        %v419 = vadd.f32 %v257, %v258
        %420 = vadd.xlane.f32.xlu0 %v419
        %v421 = vpop.xlane.xlu0 %420
        %v422 = vadd.f32 %v259, %v260
        %423 = vadd.xlane.f32.xlu0 %v422
        %v424 = vpop.xlane.xlu0 %423
        %v425 = vadd.f32 %v261, %v262
        %426 = vadd.xlane.f32.xlu0 %v425
        %v427 = vpop.xlane.xlu0 %426
        %v428 = vadd.f32 %v263, %v264
        %429 = vadd.xlane.f32.xlu0 %v428
        %v430 = vpop.xlane.xlu0 %429
        %v431 = vadd.f32 %v265, %v266
        %432 = vadd.xlane.f32.xlu0 %v431
        %v433 = vpop.xlane.xlu0 %432
        %v434 = vadd.f32 %v267, %v268
        %435 = vadd.xlane.f32.xlu0 %v434
        %v436 = vpop.xlane.xlu0 %435
        %v437 = vadd.f32 %v269, %v270
        %438 = vadd.xlane.f32.xlu0 %v437
        %v439 = vpop.xlane.xlu0 %438
        %v440 = vadd.f32 %v271, %v272
        %441 = vadd.xlane.f32.xlu0 %v440
        %v442 = vpop.xlane.xlu0 %441
        %v443 = vadd.f32 %v273, %v274
        %444 = vadd.xlane.f32.xlu0 %v443
        %v445 = vpop.xlane.xlu0 %444
        %v446 = vadd.f32 %v275, %v276
        %447 = vadd.xlane.f32.xlu0 %v446
        %v448 = vpop.xlane.xlu0 %447
        %v449 = vadd.f32 %v277, %v278
        %450 = vadd.xlane.f32.xlu0 %v449
        %v451 = vpop.xlane.xlu0 %450
        %v452 = vadd.f32 %v279, %v280
        %453 = vadd.xlane.f32.xlu0 %v452
        %v454 = vpop.xlane.xlu0 %453
        %v455 = vadd.f32 %v281, %v282
        %456 = vadd.xlane.f32.xlu0 %v455
        %v457 = vpop.xlane.xlu0 %456
        %v458 = vadd.f32 %v283, %v284
        %459 = vadd.xlane.f32.xlu0 %v458
        %v460 = vpop.xlane.xlu0 %459
        %v461 = vadd.f32 %v285, %v286
        %462 = vadd.xlane.f32.xlu0 %v461
        %v463 = vpop.xlane.xlu0 %462
        %v464 = vadd.f32 %v287, %v288
        %465 = vadd.xlane.f32.xlu0 %v464
        %v466 = vpop.xlane.xlu0 %465
        %v467 = vadd.f32 %v289, %v290
        %468 = vadd.xlane.f32.xlu0 %v467
        %v469 = vpop.xlane.xlu0 %468
        %v470 = vadd.f32 %v291, %v292
        %471 = vadd.xlane.f32.xlu0 %v470
        %v472 = vpop.xlane.xlu0 %471
        %v473 = vadd.f32 %v293, %v294
        %474 = vadd.xlane.f32.xlu0 %v473
        %v475 = vpop.xlane.xlu0 %474
        %v476 = vadd.f32 %v295, %v296
        %477 = vadd.xlane.f32.xlu0 %v476
        %v478 = vpop.xlane.xlu0 %477
        %v479 = vadd.f32 %v297, %v298
        %480 = vadd.xlane.f32.xlu0 %v479
        %v481 = vpop.xlane.xlu0 %480
        %v482 = vadd.f32 %v299, %v300
        %483 = vadd.xlane.f32.xlu0 %v482
        %v484 = vpop.xlane.xlu0 %483
        %v485 = vadd.f32 %v301, %v302
        %486 = vadd.xlane.f32.xlu0 %v485
        %v487 = vpop.xlane.xlu0 %486
        %v488 = vadd.f32 %v303, %v304
        %489 = vadd.xlane.f32.xlu0 %v488
        %v490 = vpop.xlane.xlu0 %489
        %v491 = vadd.f32 %v305, %v306
        %492 = vadd.xlane.f32.xlu0 %v491
        %v493 = vpop.xlane.xlu0 %492
        %v494 = vadd.f32 %v307, %v308
        %495 = vadd.xlane.f32.xlu0 %v494
        %v496 = vpop.xlane.xlu0 %495
        %v497 = vadd.f32 %v309, %v310
        %498 = vadd.xlane.f32.xlu0 %v497
        %v499 = vpop.xlane.xlu0 %498
        %v500 = vadd.f32 %v311, %v312
        %501 = vadd.xlane.f32.xlu0 %v500
        %v502 = vpop.xlane.xlu0 %501
        %v503 = vadd.f32 %v313, %v314
        %504 = vadd.xlane.f32.xlu0 %v503
        %v505 = vpop.xlane.xlu0 %504
        %v506 = vadd.f32 %v315, %v316
        %507 = vadd.xlane.f32.xlu0 %v506
        %v508 = vpop.xlane.xlu0 %507
        %v509 = vmul.f32 %v319, 0.00390625
        %v510 = vmul.f32 %v322, 0.00390625
        %v511 = vmul.f32 %v325, 0.00390625
        %v512 = vmul.f32 %v328, 0.00390625
        %v513 = vmul.f32 %v331, 0.00390625
        %v514 = vmul.f32 %v334, 0.00390625
        %v515 = vmul.f32 %v337, 0.00390625
        %v516 = vmul.f32 %v340, 0.00390625
        %v517 = vmul.f32 %v343, 0.00390625
        %v518 = vmul.f32 %v346, 0.00390625
        %v519 = vmul.f32 %v349, 0.00390625
        %v520 = vmul.f32 %v352, 0.00390625
        %v521 = vmul.f32 %v355, 0.00390625
        %v522 = vmul.f32 %v358, 0.00390625
        %v523 = vmul.f32 %v361, 0.00390625
        %v524 = vmul.f32 %v364, 0.00390625
        %v525 = vmul.f32 %v367, 0.00390625
        %v526 = vmul.f32 %v370, 0.00390625
        %v527 = vmul.f32 %v373, 0.00390625
        %v528 = vmul.f32 %v376, 0.00390625
        %v529 = vmul.f32 %v379, 0.00390625
        %v530 = vmul.f32 %v382, 0.00390625
        %v531 = vmul.f32 %v385, 0.00390625
        %v532 = vmul.f32 %v388, 0.00390625
        %v533 = vmul.f32 %v391, 0.00390625
        %v534 = vmul.f32 %v394, 0.00390625
        %v535 = vmul.f32 %v397, 0.00390625
        %v536 = vmul.f32 %v400, 0.00390625
        %v537 = vmul.f32 %v403, 0.00390625
        %v538 = vmul.f32 %v406, 0.00390625
        %v539 = vmul.f32 %v409, 0.00390625
        %v540 = vmul.f32 %v412, 0.00390625
        %v541 = vmul.f32 %v415, 0.00390625
        %v542 = vmul.f32 %v418, 0.00390625
        %v543 = vmul.f32 %v421, 0.00390625
        %v544 = vmul.f32 %v424, 0.00390625
        %v545 = vmul.f32 %v427, 0.00390625
        %v546 = vmul.f32 %v430, 0.00390625
        %v547 = vmul.f32 %v433, 0.00390625
        %v548 = vmul.f32 %v436, 0.00390625
        %v549 = vmul.f32 %v439, 0.00390625
        %v550 = vmul.f32 %v442, 0.00390625
        %v551 = vmul.f32 %v445, 0.00390625
        %v552 = vmul.f32 %v448, 0.00390625
        %v553 = vmul.f32 %v451, 0.00390625
        %v554 = vmul.f32 %v454, 0.00390625
        %v555 = vmul.f32 %v457, 0.00390625
        %v556 = vmul.f32 %v460, 0.00390625
        %v557 = vmul.f32 %v463, 0.00390625
        %v558 = vmul.f32 %v466, 0.00390625
        %v559 = vmul.f32 %v469, 0.00390625
        %v560 = vmul.f32 %v472, 0.00390625
        %v561 = vmul.f32 %v475, 0.00390625
        %v562 = vmul.f32 %v478, 0.00390625
        %v563 = vmul.f32 %v481, 0.00390625
        %v564 = vmul.f32 %v484, 0.00390625
        %v565 = vmul.f32 %v487, 0.00390625
        %v566 = vmul.f32 %v490, 0.00390625
        %v567 = vmul.f32 %v493, 0.00390625
        %v568 = vmul.f32 %v496, 0.00390625
        %v569 = vmul.f32 %v499, 0.00390625
        %v570 = vmul.f32 %v502, 0.00390625
        %v571 = vmul.f32 %v505, 0.00390625
        %v572 = vmul.f32 %v508, 0.00390625
        %v573 = vld [vmem:[%s1] sm:$0xff]
        %v574 = vld [vmem:[%s1 + $0x8] sm:$0xff]
        %v575 = vld [vmem:[%s1 + $0x10] sm:$0xff]
        %v576 = vld [vmem:[%s1 + $0x18] sm:$0xff]
        %v577 = vld [vmem:[%s1 + $0x20] sm:$0xff]
        %v578 = vld [vmem:[%s1 + $0x28] sm:$0xff]
        %v579 = vld [vmem:[%s1 + $0x30] sm:$0xff]
        %v580 = vld [vmem:[%s1 + $0x38] sm:$0xff]
        %v581 = vld [vmem:[%s1 + $0x40] sm:$0xff]
        %v582 = vld [vmem:[%s1 + $0x48] sm:$0xff]
        %v583 = vld [vmem:[%s1 + $0x50] sm:$0xff]
        %v584 = vld [vmem:[%s1 + $0x58] sm:$0xff]
        %v585 = vld [vmem:[%s1 + $0x60] sm:$0xff]
        %v586 = vld [vmem:[%s1 + $0x68] sm:$0xff]
        %v587 = vld [vmem:[%s1 + $0x70] sm:$0xff]
        %v588 = vld [vmem:[%s1 + $0x78] sm:$0xff]
        %v589 = vld [vmem:[%s1 + $0x80] sm:$0xff]
        %v590 = vld [vmem:[%s1 + $0x88] sm:$0xff]
        %v591 = vld [vmem:[%s1 + $0x90] sm:$0xff]
        %v592 = vld [vmem:[%s1 + $0x98] sm:$0xff]
        %v593 = vld [vmem:[%s1 + $0xa0] sm:$0xff]
        %v594 = vld [vmem:[%s1 + $0xa8] sm:$0xff]
        %v595 = vld [vmem:[%s1 + $0xb0] sm:$0xff]
        %v596 = vld [vmem:[%s1 + $0xb8] sm:$0xff]
        %v597 = vld [vmem:[%s1 + $0xc0] sm:$0xff]
        %v598 = vld [vmem:[%s1 + $0xc8] sm:$0xff]
        %v599 = vld [vmem:[%s1 + $0xd0] sm:$0xff]
        %v600 = vld [vmem:[%s1 + $0xd8] sm:$0xff]
        %v601 = vld [vmem:[%s1 + $0xe0] sm:$0xff]
        %v602 = vld [vmem:[%s1 + $0xe8] sm:$0xff]
        %v603 = vld [vmem:[%s1 + $0xf0] sm:$0xff]
        %v604 = vld [vmem:[%s1 + $0xf8] sm:$0xff]
        %v605 = vld [vmem:[%s1 + $0x100] sm:$0xff]
        %v606 = vld [vmem:[%s1 + $0x108] sm:$0xff]
        %v607 = vld [vmem:[%s1 + $0x110] sm:$0xff]
        %v608 = vld [vmem:[%s1 + $0x118] sm:$0xff]
        %v609 = vld [vmem:[%s1 + $0x120] sm:$0xff]
        %v610 = vld [vmem:[%s1 + $0x128] sm:$0xff]
        %v611 = vld [vmem:[%s1 + $0x130] sm:$0xff]
        %v612 = vld [vmem:[%s1 + $0x138] sm:$0xff]
        %v613 = vld [vmem:[%s1 + $0x140] sm:$0xff]
        %v614 = vld [vmem:[%s1 + $0x148] sm:$0xff]
        %v615 = vld [vmem:[%s1 + $0x150] sm:$0xff]
        %v616 = vld [vmem:[%s1 + $0x158] sm:$0xff]
        %v617 = vld [vmem:[%s1 + $0x160] sm:$0xff]
        %v618 = vld [vmem:[%s1 + $0x168] sm:$0xff]
        %v619 = vld [vmem:[%s1 + $0x170] sm:$0xff]
        %v620 = vld [vmem:[%s1 + $0x178] sm:$0xff]
        %v621 = vld [vmem:[%s1 + $0x180] sm:$0xff]
        %v622 = vld [vmem:[%s1 + $0x188] sm:$0xff]
        %v623 = vld [vmem:[%s1 + $0x190] sm:$0xff]
        %v624 = vld [vmem:[%s1 + $0x198] sm:$0xff]
        %v625 = vld [vmem:[%s1 + $0x1a0] sm:$0xff]
        %v626 = vld [vmem:[%s1 + $0x1a8] sm:$0xff]
        %v627 = vld [vmem:[%s1 + $0x1b0] sm:$0xff]
        %v628 = vld [vmem:[%s1 + $0x1b8] sm:$0xff]
        %v629 = vld [vmem:[%s1 + $0x1c0] sm:$0xff]
        %v630 = vld [vmem:[%s1 + $0x1c8] sm:$0xff]
        %v631 = vld [vmem:[%s1 + $0x1d0] sm:$0xff]
        %v632 = vld [vmem:[%s1 + $0x1d8] sm:$0xff]
        %v633 = vld [vmem:[%s1 + $0x1e0] sm:$0xff]
        %v634 = vld [vmem:[%s1 + $0x1e8] sm:$0xff]
        %v635 = vld [vmem:[%s1 + $0x1f0] sm:$0xff]
        %v636 = vld [vmem:[%s1 + $0x1f8] sm:$0xff]
        %v701 = vlaneseq
        %v702 = vand.u32 %v701, 127
        %v703 = vlaneseq
        %v704 = vshrl.u32 %v703, 7
        %v705 = vsub.s32 %v702, %v704
        %v706 = vrot.slane %v509, %v705
        %v707 = vadd.s32 %v702, 4294967288
        %v708 = vlaneseq
        %v709 = vshrl.u32 %v708, 7
        %v710 = vsub.s32 %v707, %v709
        %v711 = vrot.slane %v510, %v710
        %vm712 = vcmask 130112
        %v713 = vsel %vm712, %v711, %v706
        %v714 = vadd.s32 %v702, 4294967280
        %v715 = vlaneseq
        %v716 = vshrl.u32 %v715, 7
        %v717 = vsub.s32 %v714, %v716
        %v718 = vrot.slane %v511, %v717
        %vm719 = vcmask 195712
        %v720 = vsel %vm719, %v718, %v713
        %v721 = vadd.s32 %v702, 4294967272
        %v722 = vlaneseq
        %v723 = vshrl.u32 %v722, 7
        %v724 = vsub.s32 %v721, %v723
        %v725 = vrot.slane %v512, %v724
        %vm726 = vcmask 261312
        %v727 = vsel %vm726, %v725, %v720
        %v728 = vadd.s32 %v702, 4294967264
        %v729 = vlaneseq
        %v730 = vshrl.u32 %v729, 7
        %v731 = vsub.s32 %v728, %v730
        %v732 = vrot.slane %v513, %v731
        %vm733 = vcmask 326912
        %v734 = vsel %vm733, %v732, %v727
        %v735 = vadd.s32 %v702, 4294967256
        %v736 = vlaneseq
        %v737 = vshrl.u32 %v736, 7
        %v738 = vsub.s32 %v735, %v737
        %v739 = vrot.slane %v514, %v738
        %vm740 = vcmask 392512
        %v741 = vsel %vm740, %v739, %v734
        %v742 = vadd.s32 %v702, 4294967248
        %v743 = vlaneseq
        %v744 = vshrl.u32 %v743, 7
        %v745 = vsub.s32 %v742, %v744
        %v746 = vrot.slane %v515, %v745
        %vm747 = vcmask 458112
        %v748 = vsel %vm747, %v746, %v741
        %v749 = vadd.s32 %v702, 4294967240
        %v750 = vlaneseq
        %v751 = vshrl.u32 %v750, 7
        %v752 = vsub.s32 %v749, %v751
        %v753 = vrot.slane %v516, %v752
        %vm754 = vcmask 523712
        %v755 = vsel %vm754, %v753, %v748
        %v756 = vadd.s32 %v702, 4294967232
        %v757 = vlaneseq
        %v758 = vshrl.u32 %v757, 7
        %v759 = vsub.s32 %v756, %v758
        %v760 = vrot.slane %v517, %v759
        %vm761 = vcmask 589312
        %v762 = vsel %vm761, %v760, %v755
        %v763 = vadd.s32 %v702, 4294967224
        %v764 = vlaneseq
        %v765 = vshrl.u32 %v764, 7
        %v766 = vsub.s32 %v763, %v765
        %v767 = vrot.slane %v518, %v766
        %vm768 = vcmask 654912
        %v769 = vsel %vm768, %v767, %v762
        %v770 = vadd.s32 %v702, 4294967216
        %v771 = vlaneseq
        %v772 = vshrl.u32 %v771, 7
        %v773 = vsub.s32 %v770, %v772
        %v774 = vrot.slane %v519, %v773
        %vm775 = vcmask 720512
        %v776 = vsel %vm775, %v774, %v769
        %v777 = vadd.s32 %v702, 4294967208
        %v778 = vlaneseq
        %v779 = vshrl.u32 %v778, 7
        %v780 = vsub.s32 %v777, %v779
        %v781 = vrot.slane %v520, %v780
        %vm782 = vcmask 786112
        %v783 = vsel %vm782, %v781, %v776
        %v784 = vadd.s32 %v702, 4294967200
        %v785 = vlaneseq
        %v786 = vshrl.u32 %v785, 7
        %v787 = vsub.s32 %v784, %v786
        %v788 = vrot.slane %v521, %v787
        %vm789 = vcmask 851712
        %v790 = vsel %vm789, %v788, %v783
        %v791 = vadd.s32 %v702, 4294967192
        %v792 = vlaneseq
        %v793 = vshrl.u32 %v792, 7
        %v794 = vsub.s32 %v791, %v793
        %v795 = vrot.slane %v522, %v794
        %vm796 = vcmask 917312
        %v797 = vsel %vm796, %v795, %v790
        %v798 = vadd.s32 %v702, 4294967184
        %v799 = vlaneseq
        %v800 = vshrl.u32 %v799, 7
        %v801 = vsub.s32 %v798, %v800
        %v802 = vrot.slane %v523, %v801
        %vm803 = vcmask 982912
        %v804 = vsel %vm803, %v802, %v797
        %v805 = vadd.s32 %v702, 4294967176
        %v806 = vlaneseq
        %v807 = vshrl.u32 %v806, 7
        %v808 = vsub.s32 %v805, %v807
        %v809 = vrot.slane %v524, %v808
        %vm810 = vcmask 1048512
        %v811 = vsel %vm810, %v809, %v804
        %v812 = vlaneseq
        %v813 = vshrl.u32 %v812, 7
        %v814 = vsub.s32 %v702, %v813
        %v815 = vrot.slane %v525, %v814
        %v816 = vlaneseq
        %v817 = vshrl.u32 %v816, 7
        %v818 = vsub.s32 %v707, %v817
        %v819 = vrot.slane %v526, %v818
        %v820 = vsel %vm712, %v819, %v815
        %v821 = vlaneseq
        %v822 = vshrl.u32 %v821, 7
        %v823 = vsub.s32 %v714, %v822
        %v824 = vrot.slane %v527, %v823
        %v825 = vsel %vm719, %v824, %v820
        %v826 = vlaneseq
        %v827 = vshrl.u32 %v826, 7
        %v828 = vsub.s32 %v721, %v827
        %v829 = vrot.slane %v528, %v828
        %v830 = vsel %vm726, %v829, %v825
        %v831 = vlaneseq
        %v832 = vshrl.u32 %v831, 7
        %v833 = vsub.s32 %v728, %v832
        %v834 = vrot.slane %v529, %v833
        %v835 = vsel %vm733, %v834, %v830
        %v836 = vlaneseq
        %v837 = vshrl.u32 %v836, 7
        %v838 = vsub.s32 %v735, %v837
        %v839 = vrot.slane %v530, %v838
        %v840 = vsel %vm740, %v839, %v835
        %v841 = vlaneseq
        %v842 = vshrl.u32 %v841, 7
        %v843 = vsub.s32 %v742, %v842
        %v844 = vrot.slane %v531, %v843
        %v845 = vsel %vm747, %v844, %v840
        %v846 = vlaneseq
        %v847 = vshrl.u32 %v846, 7
        %v848 = vsub.s32 %v749, %v847
        %v849 = vrot.slane %v532, %v848
        %v850 = vsel %vm754, %v849, %v845
        %v851 = vlaneseq
        %v852 = vshrl.u32 %v851, 7
        %v853 = vsub.s32 %v756, %v852
        %v854 = vrot.slane %v533, %v853
        %v855 = vsel %vm761, %v854, %v850
        %v856 = vlaneseq
        %v857 = vshrl.u32 %v856, 7
        %v858 = vsub.s32 %v763, %v857
        %v859 = vrot.slane %v534, %v858
        %v860 = vsel %vm768, %v859, %v855
        %v861 = vlaneseq
        %v862 = vshrl.u32 %v861, 7
        %v863 = vsub.s32 %v770, %v862
        %v864 = vrot.slane %v535, %v863
        %v865 = vsel %vm775, %v864, %v860
        %v866 = vlaneseq
        %v867 = vshrl.u32 %v866, 7
        %v868 = vsub.s32 %v777, %v867
        %v869 = vrot.slane %v536, %v868
        %v870 = vsel %vm782, %v869, %v865
        %v871 = vlaneseq
        %v872 = vshrl.u32 %v871, 7
        %v873 = vsub.s32 %v784, %v872
        %v874 = vrot.slane %v537, %v873
        %v875 = vsel %vm789, %v874, %v870
        %v876 = vlaneseq
        %v877 = vshrl.u32 %v876, 7
        %v878 = vsub.s32 %v791, %v877
        %v879 = vrot.slane %v538, %v878
        %v880 = vsel %vm796, %v879, %v875
        %v881 = vlaneseq
        %v882 = vshrl.u32 %v881, 7
        %v883 = vsub.s32 %v798, %v882
        %v884 = vrot.slane %v539, %v883
        %v885 = vsel %vm803, %v884, %v880
        %v886 = vlaneseq
        %v887 = vshrl.u32 %v886, 7
        %v888 = vsub.s32 %v805, %v887
        %v889 = vrot.slane %v540, %v888
        %v890 = vsel %vm810, %v889, %v885
        %v891 = vlaneseq
        %v892 = vshrl.u32 %v891, 7
        %v893 = vsub.s32 %v702, %v892
        %v894 = vrot.slane %v541, %v893
        %v895 = vlaneseq
        %v896 = vshrl.u32 %v895, 7
        %v897 = vsub.s32 %v707, %v896
        %v898 = vrot.slane %v542, %v897
        %v899 = vsel %vm712, %v898, %v894
        %v900 = vlaneseq
        %v901 = vshrl.u32 %v900, 7
        %v902 = vsub.s32 %v714, %v901
        %v903 = vrot.slane %v543, %v902
        %v904 = vsel %vm719, %v903, %v899
        %v905 = vlaneseq
        %v906 = vshrl.u32 %v905, 7
        %v907 = vsub.s32 %v721, %v906
        %v908 = vrot.slane %v544, %v907
        %v909 = vsel %vm726, %v908, %v904
        %v910 = vlaneseq
        %v911 = vshrl.u32 %v910, 7
        %v912 = vsub.s32 %v728, %v911
        %v913 = vrot.slane %v545, %v912
        %v914 = vsel %vm733, %v913, %v909
        %v915 = vlaneseq
        %v916 = vshrl.u32 %v915, 7
        %v917 = vsub.s32 %v735, %v916
        %v918 = vrot.slane %v546, %v917
        %v919 = vsel %vm740, %v918, %v914
        %v920 = vlaneseq
        %v921 = vshrl.u32 %v920, 7
        %v922 = vsub.s32 %v742, %v921
        %v923 = vrot.slane %v547, %v922
        %v924 = vsel %vm747, %v923, %v919
        %v925 = vlaneseq
        %v926 = vshrl.u32 %v925, 7
        %v927 = vsub.s32 %v749, %v926
        %v928 = vrot.slane %v548, %v927
        %v929 = vsel %vm754, %v928, %v924
        %v930 = vlaneseq
        %v931 = vshrl.u32 %v930, 7
        %v932 = vsub.s32 %v756, %v931
        %v933 = vrot.slane %v549, %v932
        %v934 = vsel %vm761, %v933, %v929
        %v935 = vlaneseq
        %v936 = vshrl.u32 %v935, 7
        %v937 = vsub.s32 %v763, %v936
        %v938 = vrot.slane %v550, %v937
        %v939 = vsel %vm768, %v938, %v934
        %v940 = vlaneseq
        %v941 = vshrl.u32 %v940, 7
        %v942 = vsub.s32 %v770, %v941
        %v943 = vrot.slane %v551, %v942
        %v944 = vsel %vm775, %v943, %v939
        %v945 = vlaneseq
        %v946 = vshrl.u32 %v945, 7
        %v947 = vsub.s32 %v777, %v946
        %v948 = vrot.slane %v552, %v947
        %v949 = vsel %vm782, %v948, %v944
        %v950 = vlaneseq
        %v951 = vshrl.u32 %v950, 7
        %v952 = vsub.s32 %v784, %v951
        %v953 = vrot.slane %v553, %v952
        %v954 = vsel %vm789, %v953, %v949
        %v955 = vlaneseq
        %v956 = vshrl.u32 %v955, 7
        %v957 = vsub.s32 %v791, %v956
        %v958 = vrot.slane %v554, %v957
        %v959 = vsel %vm796, %v958, %v954
        %v960 = vlaneseq
        %v961 = vshrl.u32 %v960, 7
        %v962 = vsub.s32 %v798, %v961
        %v963 = vrot.slane %v555, %v962
        %v964 = vsel %vm803, %v963, %v959
        %v965 = vlaneseq
        %v966 = vshrl.u32 %v965, 7
        %v967 = vsub.s32 %v805, %v966
        %v968 = vrot.slane %v556, %v967
        %v969 = vsel %vm810, %v968, %v964
        %v970 = vlaneseq
        %v971 = vshrl.u32 %v970, 7
        %v972 = vsub.s32 %v702, %v971
        %v973 = vrot.slane %v557, %v972
        %v974 = vlaneseq
        %v975 = vshrl.u32 %v974, 7
        %v976 = vsub.s32 %v707, %v975
        %v977 = vrot.slane %v558, %v976
        %v978 = vsel %vm712, %v977, %v973
        %v979 = vlaneseq
        %v980 = vshrl.u32 %v979, 7
        %v981 = vsub.s32 %v714, %v980
        %v982 = vrot.slane %v559, %v981
        %v983 = vsel %vm719, %v982, %v978
        %v984 = vlaneseq
        %v985 = vshrl.u32 %v984, 7
        %v986 = vsub.s32 %v721, %v985
        %v987 = vrot.slane %v560, %v986
        %v988 = vsel %vm726, %v987, %v983
        %v989 = vlaneseq
        %v990 = vshrl.u32 %v989, 7
        %v991 = vsub.s32 %v728, %v990
        %v992 = vrot.slane %v561, %v991
        %v993 = vsel %vm733, %v992, %v988
        %v994 = vlaneseq
        %v995 = vshrl.u32 %v994, 7
        %v996 = vsub.s32 %v735, %v995
        %v997 = vrot.slane %v562, %v996
        %v998 = vsel %vm740, %v997, %v993
        %v999 = vlaneseq
        %v1000 = vshrl.u32 %v999, 7
        %v1001 = vsub.s32 %v742, %v1000
        %v1002 = vrot.slane %v563, %v1001
        %v1003 = vsel %vm747, %v1002, %v998
        %v1004 = vlaneseq
        %v1005 = vshrl.u32 %v1004, 7
        %v1006 = vsub.s32 %v749, %v1005
        %v1007 = vrot.slane %v564, %v1006
        %v1008 = vsel %vm754, %v1007, %v1003
        %v1009 = vlaneseq
        %v1010 = vshrl.u32 %v1009, 7
        %v1011 = vsub.s32 %v756, %v1010
        %v1012 = vrot.slane %v565, %v1011
        %v1013 = vsel %vm761, %v1012, %v1008
        %v1014 = vlaneseq
        %v1015 = vshrl.u32 %v1014, 7
        %v1016 = vsub.s32 %v763, %v1015
        %v1017 = vrot.slane %v566, %v1016
        %v1018 = vsel %vm768, %v1017, %v1013
        %v1019 = vlaneseq
        %v1020 = vshrl.u32 %v1019, 7
        %v1021 = vsub.s32 %v770, %v1020
        %v1022 = vrot.slane %v567, %v1021
        %v1023 = vsel %vm775, %v1022, %v1018
        %v1024 = vlaneseq
        %v1025 = vshrl.u32 %v1024, 7
        %v1026 = vsub.s32 %v777, %v1025
        %v1027 = vrot.slane %v568, %v1026
        %v1028 = vsel %vm782, %v1027, %v1023
        %v1029 = vlaneseq
        %v1030 = vshrl.u32 %v1029, 7
        %v1031 = vsub.s32 %v784, %v1030
        %v1032 = vrot.slane %v569, %v1031
        %v1033 = vsel %vm789, %v1032, %v1028
        %v1034 = vlaneseq
        %v1035 = vshrl.u32 %v1034, 7
        %v1036 = vsub.s32 %v791, %v1035
        %v1037 = vrot.slane %v570, %v1036
        %v1038 = vsel %vm796, %v1037, %v1033
        %v1039 = vlaneseq
        %v1040 = vshrl.u32 %v1039, 7
        %v1041 = vsub.s32 %v798, %v1040
        %v1042 = vrot.slane %v571, %v1041
        %v1043 = vsel %vm803, %v1042, %v1038
        %v1044 = vlaneseq
        %v1045 = vshrl.u32 %v1044, 7
        %v1046 = vsub.s32 %v805, %v1045
        %v1047 = vrot.slane %v572, %v1046
        %v1048 = vsel %vm810, %v1047, %v1043
        %1053 = vmatprep.subr.mxu0 0.0
        %1054 = vmatpush1.msra.mxu0 %v573
        %1055 = vmatprep.subr.mxu0 0.0
        %1056 = vmatpush1.msra.mxu0 %v574
        %1057 = vmatprep.subr.mxu0 0.0
        %1058 = vmatpush1.msra.mxu0 %v575
        %1059 = vmatprep.subr.mxu0 0.0
        %1060 = vmatpush1.msra.mxu0 %v576
        %1061 = vmatprep.subr.mxu0 0.0
        %1062 = vmatpush1.msra.mxu0 %v577
        %1063 = vmatprep.subr.mxu0 0.0
        %1064 = vmatpush1.msra.mxu0 %v578
        %1065 = vmatprep.subr.mxu0 0.0
        %1066 = vmatpush1.msra.mxu0 %v579
        %1067 = vmatprep.subr.mxu0 0.0
        %1068 = vmatpush1.msra.mxu0 %v580
        %1069 = vmatprep.subr.mxu0 0.0
        %1070 = vmatpush1.msra.mxu0 %v581
        %1071 = vmatprep.subr.mxu0 0.0
        %1072 = vmatpush1.msra.mxu0 %v582
        %1073 = vmatprep.subr.mxu0 0.0
        %1074 = vmatpush1.msra.mxu0 %v583
        %1075 = vmatprep.subr.mxu0 0.0
        %1076 = vmatpush1.msra.mxu0 %v584
        %1077 = vmatprep.subr.mxu0 0.0
        %1078 = vmatpush1.msra.mxu0 %v585
        %1079 = vmatprep.subr.mxu0 0.0
        %1080 = vmatpush1.msra.mxu0 %v586
        %1081 = vmatprep.subr.mxu0 0.0
        %1082 = vmatpush1.msra.mxu0 %v587
        %1083 = vmatprep.subr.mxu0 0.0
        %1084 = vmatpush1.msra.mxu0 %v588
        %1085 = vmatprep.subr.mxu0 0.0
        %1086 = vmatpush1.msra.mxu0 %v589
        %1087 = vmatprep.subr.mxu0 0.0
        %1088 = vmatpush1.msra.mxu0 %v590
        %1089 = vmatprep.subr.mxu0 0.0
        %1090 = vmatpush1.msra.mxu0 %v591
        %1091 = vmatprep.subr.mxu0 0.0
        %1092 = vmatpush1.msra.mxu0 %v592
        %1093 = vmatprep.subr.mxu0 0.0
        %1094 = vmatpush1.msra.mxu0 %v593
        %1095 = vmatprep.subr.mxu0 0.0
        %1096 = vmatpush1.msra.mxu0 %v594
        %1097 = vmatprep.subr.mxu0 0.0
        %1098 = vmatpush1.msra.mxu0 %v595
        %1099 = vmatprep.subr.mxu0 0.0
        %1100 = vmatpush1.msra.mxu0 %v596
        %1101 = vmatprep.subr.mxu0 0.0
        %1102 = vmatpush1.msra.mxu0 %v597
        %1103 = vmatprep.subr.mxu0 0.0
        %1104 = vmatpush1.msra.mxu0 %v598
        %1105 = vmatprep.subr.mxu0 0.0
        %1106 = vmatpush1.msra.mxu0 %v599
        %1107 = vmatprep.subr.mxu0 0.0
        %1108 = vmatpush1.msra.mxu0 %v600
        %1109 = vmatprep.subr.mxu0 0.0
        %1110 = vmatpush1.msra.mxu0 %v601
        %1111 = vmatprep.subr.mxu0 0.0
        %1112 = vmatpush1.msra.mxu0 %v602
        %1113 = vmatprep.subr.mxu0 0.0
        %1114 = vmatpush1.msra.mxu0 %v603
        %1115 = vmatprep.subr.mxu0 0.0
        %1116 = vmatpush1.msra.mxu0 %v604
        %1117 = vmatprep.mubr.f32.mxu0 %v890
        %1118 = vmatmul.mubr.f32.gmra.mrb[0].mxu0 %v811
        %v1119 = vpop.f32.mrb[0].mxu0
        %v1120 = vadd.f32 0.0, %v1119
        %v1121 = vpop.f32.mrb[0].mxu0
        %1122 = vdwg.mxu0
        %1123 = vmatprep.subr.mxu0 0.0
        %1124 = vmatpush1.msra.mxu0 %v605
        %1125 = vmatprep.subr.mxu0 0.0
        %1126 = vmatpush1.msra.mxu0 %v606
        %1127 = vmatprep.subr.mxu0 0.0
        %1128 = vmatpush1.msra.mxu0 %v607
        %1129 = vmatprep.subr.mxu0 0.0
        %1130 = vmatpush1.msra.mxu0 %v608
        %1131 = vmatprep.subr.mxu0 0.0
        %1132 = vmatpush1.msra.mxu0 %v609
        %1133 = vmatprep.subr.mxu0 0.0
        %1134 = vmatpush1.msra.mxu0 %v610
        %1135 = vmatprep.subr.mxu0 0.0
        %1136 = vmatpush1.msra.mxu0 %v611
        %1137 = vmatprep.subr.mxu0 0.0
        %1138 = vmatpush1.msra.mxu0 %v612
        %1139 = vmatprep.subr.mxu0 0.0
        %1140 = vmatpush1.msra.mxu0 %v613
        %1141 = vmatprep.subr.mxu0 0.0
        %1142 = vmatpush1.msra.mxu0 %v614
        %1143 = vmatprep.subr.mxu0 0.0
        %1144 = vmatpush1.msra.mxu0 %v615
        %1145 = vmatprep.subr.mxu0 0.0
        %1146 = vmatpush1.msra.mxu0 %v616
        %1147 = vmatprep.subr.mxu0 0.0
        %1148 = vmatpush1.msra.mxu0 %v617
        %1149 = vmatprep.subr.mxu0 0.0
        %1150 = vmatpush1.msra.mxu0 %v618
        %1151 = vmatprep.subr.mxu0 0.0
        %1152 = vmatpush1.msra.mxu0 %v619
        %1153 = vmatprep.subr.mxu0 0.0
        %1154 = vmatpush1.msra.mxu0 %v620
        %1155 = vmatprep.subr.mxu0 0.0
        %1156 = vmatpush1.msra.mxu0 %v621
        %1157 = vmatprep.subr.mxu0 0.0
        %1158 = vmatpush1.msra.mxu0 %v622
        %1159 = vmatprep.subr.mxu0 0.0
        %1160 = vmatpush1.msra.mxu0 %v623
        %1161 = vmatprep.subr.mxu0 0.0
        %1162 = vmatpush1.msra.mxu0 %v624
        %1163 = vmatprep.subr.mxu0 0.0
        %1164 = vmatpush1.msra.mxu0 %v625
        %1165 = vmatprep.subr.mxu0 0.0
        %1166 = vmatpush1.msra.mxu0 %v626
        %1167 = vmatprep.subr.mxu0 0.0
        %1168 = vmatpush1.msra.mxu0 %v627
        %1169 = vmatprep.subr.mxu0 0.0
        %1170 = vmatpush1.msra.mxu0 %v628
        %1171 = vmatprep.subr.mxu0 0.0
        %1172 = vmatpush1.msra.mxu0 %v629
        %1173 = vmatprep.subr.mxu0 0.0
        %1174 = vmatpush1.msra.mxu0 %v630
        %1175 = vmatprep.subr.mxu0 0.0
        %1176 = vmatpush1.msra.mxu0 %v631
        %1177 = vmatprep.subr.mxu0 0.0
        %1178 = vmatpush1.msra.mxu0 %v632
        %1179 = vmatprep.subr.mxu0 0.0
        %1180 = vmatpush1.msra.mxu0 %v633
        %1181 = vmatprep.subr.mxu0 0.0
        %1182 = vmatpush1.msra.mxu0 %v634
        %1183 = vmatprep.subr.mxu0 0.0
        %1184 = vmatpush1.msra.mxu0 %v635
        %1185 = vmatprep.subr.mxu0 0.0
        %1186 = vmatpush1.msra.mxu0 %v636
        %1187 = vmatprep.mubr.f32.mxu0 %v1048
        %1188 = vmatmul.mubr.f32.gmra.mrb[0].mxu0 %v969
        %v1189 = vpop.f32.mrb[0].mxu0
        %v1190 = vadd.f32 %v1120, %v1189
        %v1191 = vpop.f32.mrb[0].mxu0
        %1192 = vdwg.mxu0
        %v1193 = vmax.f32 %v1190, 0.0
        %v1194 = vld [vmem:[%s2] sm:$0xff]
        %v1195 = vld [vmem:[%s2 + $0x8] sm:$0xff]
        %v1196 = vld [vmem:[%s2 + $0x10] sm:$0xff]
        %v1197 = vld [vmem:[%s2 + $0x18] sm:$0xff]
        %v1198 = vld [vmem:[%s2 + $0x20] sm:$0xff]
        %v1199 = vld [vmem:[%s2 + $0x28] sm:$0xff]
        %v1200 = vld [vmem:[%s2 + $0x30] sm:$0xff]
        %v1201 = vld [vmem:[%s2 + $0x38] sm:$0xff]
        %v1202 = vld [vmem:[%s2 + $0x40] sm:$0xff]
        %v1203 = vld [vmem:[%s2 + $0x48] sm:$0xff]
        %v1204 = vld [vmem:[%s2 + $0x50] sm:$0xff]
        %v1205 = vld [vmem:[%s2 + $0x58] sm:$0xff]
        %v1206 = vld [vmem:[%s2 + $0x60] sm:$0xff]
        %v1207 = vld [vmem:[%s2 + $0x68] sm:$0xff]
        %v1208 = vld [vmem:[%s2 + $0x70] sm:$0xff]
        %v1209 = vld [vmem:[%s2 + $0x78] sm:$0xff]
        %vm1210 = vcmask 261120
        %v1212 = vsel %vm1210, %v1193, 0
        %1214 = vmatprep.subr.mxu0 %v1195
        %1215 = vmatpush1.msra.mxu0 %v1194
        %1216 = vmatprep.subr.mxu0 %v1199
        %1217 = vmatpush1.msra.mxu0 %v1198
        %1218 = vmatprep.subr.mxu0 %v1203
        %1219 = vmatpush1.msra.mxu0 %v1202
        %1220 = vmatprep.subr.mxu0 %v1207
        %1221 = vmatpush1.msra.mxu0 %v1206
        %1222 = vmatprep.subr.mxu0 0.0
        %1223 = vmatpush1.msra.mxu0 0.0
        %1224 = vmatprep.subr.mxu0 0.0
        %1225 = vmatpush1.msra.mxu0 0.0
        %1226 = vmatprep.subr.mxu0 0.0
        %1227 = vmatpush1.msra.mxu0 0.0
        %1228 = vmatprep.subr.mxu0 0.0
        %1229 = vmatpush1.msra.mxu0 0.0
        %1230 = vmatprep.subr.mxu0 0.0
        %1231 = vmatpush1.msra.mxu0 0.0
        %1232 = vmatprep.subr.mxu0 0.0
        %1233 = vmatpush1.msra.mxu0 0.0
        %1234 = vmatprep.subr.mxu0 0.0
        %1235 = vmatpush1.msra.mxu0 0.0
        %1236 = vmatprep.subr.mxu0 0.0
        %1237 = vmatpush1.msra.mxu0 0.0
        %1238 = vmatprep.subr.mxu0 0.0
        %1239 = vmatpush1.msra.mxu0 0.0
        %1240 = vmatprep.subr.mxu0 0.0
        %1241 = vmatpush1.msra.mxu0 0.0
        %1242 = vmatprep.subr.mxu0 0.0
        %1243 = vmatpush1.msra.mxu0 0.0
        %1244 = vmatprep.subr.mxu0 0.0
        %1245 = vmatpush1.msra.mxu0 0.0
        %1246 = vmatprep.subr.mxu0 0.0
        %1247 = vmatpush1.msra.mxu0 0.0
        %1248 = vmatprep.subr.mxu0 0.0
        %1249 = vmatpush1.msra.mxu0 0.0
        %1250 = vmatprep.subr.mxu0 0.0
        %1251 = vmatpush1.msra.mxu0 0.0
        %1252 = vmatprep.subr.mxu0 0.0
        %1253 = vmatpush1.msra.mxu0 0.0
        %1254 = vmatprep.subr.mxu0 0.0
        %1255 = vmatpush1.msra.mxu0 0.0
        %1256 = vmatprep.subr.mxu0 0.0
        %1257 = vmatpush1.msra.mxu0 0.0
        %1258 = vmatprep.subr.mxu0 0.0
        %1259 = vmatpush1.msra.mxu0 0.0
        %1260 = vmatprep.subr.mxu0 0.0
        %1261 = vmatpush1.msra.mxu0 0.0
        %1262 = vmatprep.subr.mxu0 0.0
        %1263 = vmatpush1.msra.mxu0 0.0
        %1264 = vmatprep.subr.mxu0 0.0
        %1265 = vmatpush1.msra.mxu0 0.0
        %1266 = vmatprep.subr.mxu0 0.0
        %1267 = vmatpush1.msra.mxu0 0.0
        %1268 = vmatprep.subr.mxu0 0.0
        %1269 = vmatpush1.msra.mxu0 0.0
        %1270 = vmatprep.subr.mxu0 0.0
        %1271 = vmatpush1.msra.mxu0 0.0
        %1272 = vmatprep.subr.mxu0 0.0
        %1273 = vmatpush1.msra.mxu0 0.0
        %1274 = vmatprep.subr.mxu0 0.0
        %1275 = vmatpush1.msra.mxu0 0.0
        %1276 = vmatprep.subr.mxu0 0.0
        %1277 = vmatpush1.msra.mxu0 0.0
        %1278 = vmatprep.mubr.f32.mxu0 0.0
        %1279 = vmatmul.mubr.f32.gmra.mrb[0].mxu0 %v1212
        %v1280 = vpop.f32.mrb[0].mxu0
        %v1281 = vadd.f32 0.0, %v1280
        %v1282 = vpop.f32.mrb[0].mxu0
        %v1283 = vadd.f32 0.0, %v1282
        %1284 = vdwg.mxu0
        %1285 = vmatprep.subr.mxu0 %v1197
        %1286 = vmatpush1.msra.mxu0 %v1196
        %1287 = vmatprep.subr.mxu0 %v1201
        %1288 = vmatpush1.msra.mxu0 %v1200
        %1289 = vmatprep.subr.mxu0 %v1205
        %1290 = vmatpush1.msra.mxu0 %v1204
        %1291 = vmatprep.subr.mxu0 %v1209
        %1292 = vmatpush1.msra.mxu0 %v1208
        %1293 = vmatprep.subr.mxu0 0.0
        %1294 = vmatpush1.msra.mxu0 0.0
        %1295 = vmatprep.subr.mxu0 0.0
        %1296 = vmatpush1.msra.mxu0 0.0
        %1297 = vmatprep.subr.mxu0 0.0
        %1298 = vmatpush1.msra.mxu0 0.0
        %1299 = vmatprep.subr.mxu0 0.0
        %1300 = vmatpush1.msra.mxu0 0.0
        %1301 = vmatprep.subr.mxu0 0.0
        %1302 = vmatpush1.msra.mxu0 0.0
        %1303 = vmatprep.subr.mxu0 0.0
        %1304 = vmatpush1.msra.mxu0 0.0
        %1305 = vmatprep.subr.mxu0 0.0
        %1306 = vmatpush1.msra.mxu0 0.0
        %1307 = vmatprep.subr.mxu0 0.0
        %1308 = vmatpush1.msra.mxu0 0.0
        %1309 = vmatprep.subr.mxu0 0.0
        %1310 = vmatpush1.msra.mxu0 0.0
        %1311 = vmatprep.subr.mxu0 0.0
        %1312 = vmatpush1.msra.mxu0 0.0
        %1313 = vmatprep.subr.mxu0 0.0
        %1314 = vmatpush1.msra.mxu0 0.0
        %1315 = vmatprep.subr.mxu0 0.0
        %1316 = vmatpush1.msra.mxu0 0.0
        %1317 = vmatprep.subr.mxu0 0.0
        %1318 = vmatpush1.msra.mxu0 0.0
        %1319 = vmatprep.subr.mxu0 0.0
        %1320 = vmatpush1.msra.mxu0 0.0
        %1321 = vmatprep.subr.mxu0 0.0
        %1322 = vmatpush1.msra.mxu0 0.0
        %1323 = vmatprep.subr.mxu0 0.0
        %1324 = vmatpush1.msra.mxu0 0.0
        %1325 = vmatprep.subr.mxu0 0.0
        %1326 = vmatpush1.msra.mxu0 0.0
        %1327 = vmatprep.subr.mxu0 0.0
        %1328 = vmatpush1.msra.mxu0 0.0
        %1329 = vmatprep.subr.mxu0 0.0
        %1330 = vmatpush1.msra.mxu0 0.0
        %1331 = vmatprep.subr.mxu0 0.0
        %1332 = vmatpush1.msra.mxu0 0.0
        %1333 = vmatprep.subr.mxu0 0.0
        %1334 = vmatpush1.msra.mxu0 0.0
        %1335 = vmatprep.subr.mxu0 0.0
        %1336 = vmatpush1.msra.mxu0 0.0
        %1337 = vmatprep.subr.mxu0 0.0
        %1338 = vmatpush1.msra.mxu0 0.0
        %1339 = vmatprep.subr.mxu0 0.0
        %1340 = vmatpush1.msra.mxu0 0.0
        %1341 = vmatprep.subr.mxu0 0.0
        %1342 = vmatpush1.msra.mxu0 0.0
        %1343 = vmatprep.subr.mxu0 0.0
        %1344 = vmatpush1.msra.mxu0 0.0
        %1345 = vmatprep.subr.mxu0 0.0
        %1346 = vmatpush1.msra.mxu0 0.0
        %1347 = vmatprep.subr.mxu0 0.0
        %1348 = vmatpush1.msra.mxu0 0.0
        %1349 = vmatprep.mubr.f32.mxu0 0.0
        %1350 = vmatmul.mubr.f32.gmra.mrb[0].mxu0 %v1212
        %v1351 = vpop.f32.mrb[0].mxu0
        %v1352 = vadd.f32 0.0, %v1351
        %v1353 = vpop.f32.mrb[0].mxu0
        %v1354 = vadd.f32 0.0, %v1353
        %1355 = vdwg.mxu0
        %v1356 = vsub.f32 0.0, %v1281
        %v1357 = vsub.f32 0.0, %v1283
        %v1358 = vsub.f32 0.0, %v1352
        %v1359 = vsub.f32 0.0, %v1354
        %v1360 = vmul.f32 %v1356, 1.442695
        %v1361 = vpow.pop %v1360
        %v1362 = vmul.f32 %v1357, 1.442695
        %v1363 = vpow.pop %v1362
        %v1364 = vmul.f32 %v1358, 1.442695
        %v1365 = vpow.pop %v1364
        %v1366 = vmul.f32 %v1359, 1.442695
        %v1367 = vpow.pop %v1366
        %v1368 = vadd.f32 %v1361, 1.0
        %v1369 = vadd.f32 %v1363, 1.0
        %v1370 = vadd.f32 %v1365, 1.0
        %v1371 = vadd.f32 %v1367, 1.0
        %v1372 = vrcp.pop %v1368
        %v1373 = vmul.f32 1.0, %v1372
        %v1374 = vrcp.pop %v1369
        %v1375 = vmul.f32 1.0, %v1374
        %v1376 = vrcp.pop %v1370
        %v1377 = vmul.f32 1.0, %v1376
        %v1378 = vrcp.pop %v1371
        %v1379 = vmul.f32 1.0, %v1378
        %v1380 = vlaneseq
        %v1381 = vshrl.u32 %v1380, 7
        %v1382 = vsub.s32 0, %v1381
        %v1383 = vrot.slane %v1373, %v1382
        %1385 = vbcast.lane.b32.xlu0 %v1383, 256
        %v1386 = vpop.permute.xlu0 %1385
        %s1388 = sor.u32 256, 8
        %1389 = vbcast.lane.b32.xlu0 %v1383, %s1388
        %v1390 = vpop.permute.xlu0 %1389
        %s1392 = sor.u32 256, 16
        %1393 = vbcast.lane.b32.xlu0 %v1383, %s1392
        %v1394 = vpop.permute.xlu0 %1393
        %s1396 = sor.u32 256, 24
        %1397 = vbcast.lane.b32.xlu0 %v1383, %s1396
        %v1398 = vpop.permute.xlu0 %1397
        %s1400 = sor.u32 256, 32
        %1401 = vbcast.lane.b32.xlu0 %v1383, %s1400
        %v1402 = vpop.permute.xlu0 %1401
        %s1404 = sor.u32 256, 40
        %1405 = vbcast.lane.b32.xlu0 %v1383, %s1404
        %v1406 = vpop.permute.xlu0 %1405
        %s1408 = sor.u32 256, 48
        %1409 = vbcast.lane.b32.xlu0 %v1383, %s1408
        %v1410 = vpop.permute.xlu0 %1409
        %s1412 = sor.u32 256, 56
        %1413 = vbcast.lane.b32.xlu0 %v1383, %s1412
        %v1414 = vpop.permute.xlu0 %1413
        %s1416 = sor.u32 256, 64
        %1417 = vbcast.lane.b32.xlu0 %v1383, %s1416
        %v1418 = vpop.permute.xlu0 %1417
        %s1420 = sor.u32 256, 72
        %1421 = vbcast.lane.b32.xlu0 %v1383, %s1420
        %v1422 = vpop.permute.xlu0 %1421
        %s1424 = sor.u32 256, 80
        %1425 = vbcast.lane.b32.xlu0 %v1383, %s1424
        %v1426 = vpop.permute.xlu0 %1425
        %s1428 = sor.u32 256, 88
        %1429 = vbcast.lane.b32.xlu0 %v1383, %s1428
        %v1430 = vpop.permute.xlu0 %1429
        %s1432 = sor.u32 256, 96
        %1433 = vbcast.lane.b32.xlu0 %v1383, %s1432
        %v1434 = vpop.permute.xlu0 %1433
        %s1436 = sor.u32 256, 104
        %1437 = vbcast.lane.b32.xlu0 %v1383, %s1436
        %v1438 = vpop.permute.xlu0 %1437
        %s1440 = sor.u32 256, 112
        %1441 = vbcast.lane.b32.xlu0 %v1383, %s1440
        %v1442 = vpop.permute.xlu0 %1441
        %s1444 = sor.u32 256, 120
        %1445 = vbcast.lane.b32.xlu0 %v1383, %s1444
        %v1446 = vpop.permute.xlu0 %1445
        %v1447 = vlaneseq
        %v1448 = vshrl.u32 %v1447, 7
        %v1449 = vsub.s32 0, %v1448
        %v1450 = vrot.slane %v1375, %v1449
        %1452 = vbcast.lane.b32.xlu0 %v1450, 256
        %v1453 = vpop.permute.xlu0 %1452
        %s1455 = sor.u32 256, 8
        %1456 = vbcast.lane.b32.xlu0 %v1450, %s1455
        %v1457 = vpop.permute.xlu0 %1456
        %s1459 = sor.u32 256, 16
        %1460 = vbcast.lane.b32.xlu0 %v1450, %s1459
        %v1461 = vpop.permute.xlu0 %1460
        %s1463 = sor.u32 256, 24
        %1464 = vbcast.lane.b32.xlu0 %v1450, %s1463
        %v1465 = vpop.permute.xlu0 %1464
        %s1467 = sor.u32 256, 32
        %1468 = vbcast.lane.b32.xlu0 %v1450, %s1467
        %v1469 = vpop.permute.xlu0 %1468
        %s1471 = sor.u32 256, 40
        %1472 = vbcast.lane.b32.xlu0 %v1450, %s1471
        %v1473 = vpop.permute.xlu0 %1472
        %s1475 = sor.u32 256, 48
        %1476 = vbcast.lane.b32.xlu0 %v1450, %s1475
        %v1477 = vpop.permute.xlu0 %1476
        %s1479 = sor.u32 256, 56
        %1480 = vbcast.lane.b32.xlu0 %v1450, %s1479
        %v1481 = vpop.permute.xlu0 %1480
        %s1483 = sor.u32 256, 64
        %1484 = vbcast.lane.b32.xlu0 %v1450, %s1483
        %v1485 = vpop.permute.xlu0 %1484
        %s1487 = sor.u32 256, 72
        %1488 = vbcast.lane.b32.xlu0 %v1450, %s1487
        %v1489 = vpop.permute.xlu0 %1488
        %s1491 = sor.u32 256, 80
        %1492 = vbcast.lane.b32.xlu0 %v1450, %s1491
        %v1493 = vpop.permute.xlu0 %1492
        %s1495 = sor.u32 256, 88
        %1496 = vbcast.lane.b32.xlu0 %v1450, %s1495
        %v1497 = vpop.permute.xlu0 %1496
        %s1499 = sor.u32 256, 96
        %1500 = vbcast.lane.b32.xlu0 %v1450, %s1499
        %v1501 = vpop.permute.xlu0 %1500
        %s1503 = sor.u32 256, 104
        %1504 = vbcast.lane.b32.xlu0 %v1450, %s1503
        %v1505 = vpop.permute.xlu0 %1504
        %s1507 = sor.u32 256, 112
        %1508 = vbcast.lane.b32.xlu0 %v1450, %s1507
        %v1509 = vpop.permute.xlu0 %1508
        %s1511 = sor.u32 256, 120
        %1512 = vbcast.lane.b32.xlu0 %v1450, %s1511
        %v1513 = vpop.permute.xlu0 %1512
        %v1514 = vlaneseq
        %v1515 = vshrl.u32 %v1514, 7
        %v1516 = vsub.s32 0, %v1515
        %v1517 = vrot.slane %v1377, %v1516
        %1519 = vbcast.lane.b32.xlu0 %v1517, 256
        %v1520 = vpop.permute.xlu0 %1519
        %s1522 = sor.u32 256, 8
        %1523 = vbcast.lane.b32.xlu0 %v1517, %s1522
        %v1524 = vpop.permute.xlu0 %1523
        %s1526 = sor.u32 256, 16
        %1527 = vbcast.lane.b32.xlu0 %v1517, %s1526
        %v1528 = vpop.permute.xlu0 %1527
        %s1530 = sor.u32 256, 24
        %1531 = vbcast.lane.b32.xlu0 %v1517, %s1530
        %v1532 = vpop.permute.xlu0 %1531
        %s1534 = sor.u32 256, 32
        %1535 = vbcast.lane.b32.xlu0 %v1517, %s1534
        %v1536 = vpop.permute.xlu0 %1535
        %s1538 = sor.u32 256, 40
        %1539 = vbcast.lane.b32.xlu0 %v1517, %s1538
        %v1540 = vpop.permute.xlu0 %1539
        %s1542 = sor.u32 256, 48
        %1543 = vbcast.lane.b32.xlu0 %v1517, %s1542
        %v1544 = vpop.permute.xlu0 %1543
        %s1546 = sor.u32 256, 56
        %1547 = vbcast.lane.b32.xlu0 %v1517, %s1546
        %v1548 = vpop.permute.xlu0 %1547
        %s1550 = sor.u32 256, 64
        %1551 = vbcast.lane.b32.xlu0 %v1517, %s1550
        %v1552 = vpop.permute.xlu0 %1551
        %s1554 = sor.u32 256, 72
        %1555 = vbcast.lane.b32.xlu0 %v1517, %s1554
        %v1556 = vpop.permute.xlu0 %1555
        %s1558 = sor.u32 256, 80
        %1559 = vbcast.lane.b32.xlu0 %v1517, %s1558
        %v1560 = vpop.permute.xlu0 %1559
        %s1562 = sor.u32 256, 88
        %1563 = vbcast.lane.b32.xlu0 %v1517, %s1562
        %v1564 = vpop.permute.xlu0 %1563
        %s1566 = sor.u32 256, 96
        %1567 = vbcast.lane.b32.xlu0 %v1517, %s1566
        %v1568 = vpop.permute.xlu0 %1567
        %s1570 = sor.u32 256, 104
        %1571 = vbcast.lane.b32.xlu0 %v1517, %s1570
        %v1572 = vpop.permute.xlu0 %1571
        %s1574 = sor.u32 256, 112
        %1575 = vbcast.lane.b32.xlu0 %v1517, %s1574
        %v1576 = vpop.permute.xlu0 %1575
        %s1578 = sor.u32 256, 120
        %1579 = vbcast.lane.b32.xlu0 %v1517, %s1578
        %v1580 = vpop.permute.xlu0 %1579
        %v1581 = vlaneseq
        %v1582 = vshrl.u32 %v1581, 7
        %v1583 = vsub.s32 0, %v1582
        %v1584 = vrot.slane %v1379, %v1583
        %1586 = vbcast.lane.b32.xlu0 %v1584, 256
        %v1587 = vpop.permute.xlu0 %1586
        %s1589 = sor.u32 256, 8
        %1590 = vbcast.lane.b32.xlu0 %v1584, %s1589
        %v1591 = vpop.permute.xlu0 %1590
        %s1593 = sor.u32 256, 16
        %1594 = vbcast.lane.b32.xlu0 %v1584, %s1593
        %v1595 = vpop.permute.xlu0 %1594
        %s1597 = sor.u32 256, 24
        %1598 = vbcast.lane.b32.xlu0 %v1584, %s1597
        %v1599 = vpop.permute.xlu0 %1598
        %s1601 = sor.u32 256, 32
        %1602 = vbcast.lane.b32.xlu0 %v1584, %s1601
        %v1603 = vpop.permute.xlu0 %1602
        %s1605 = sor.u32 256, 40
        %1606 = vbcast.lane.b32.xlu0 %v1584, %s1605
        %v1607 = vpop.permute.xlu0 %1606
        %s1609 = sor.u32 256, 48
        %1610 = vbcast.lane.b32.xlu0 %v1584, %s1609
        %v1611 = vpop.permute.xlu0 %1610
        %s1613 = sor.u32 256, 56
        %1614 = vbcast.lane.b32.xlu0 %v1584, %s1613
        %v1615 = vpop.permute.xlu0 %1614
        %s1617 = sor.u32 256, 64
        %1618 = vbcast.lane.b32.xlu0 %v1584, %s1617
        %v1619 = vpop.permute.xlu0 %1618
        %s1621 = sor.u32 256, 72
        %1622 = vbcast.lane.b32.xlu0 %v1584, %s1621
        %v1623 = vpop.permute.xlu0 %1622
        %s1625 = sor.u32 256, 80
        %1626 = vbcast.lane.b32.xlu0 %v1584, %s1625
        %v1627 = vpop.permute.xlu0 %1626
        %s1629 = sor.u32 256, 88
        %1630 = vbcast.lane.b32.xlu0 %v1584, %s1629
        %v1631 = vpop.permute.xlu0 %1630
        %s1633 = sor.u32 256, 96
        %1634 = vbcast.lane.b32.xlu0 %v1584, %s1633
        %v1635 = vpop.permute.xlu0 %1634
        %s1637 = sor.u32 256, 104
        %1638 = vbcast.lane.b32.xlu0 %v1584, %s1637
        %v1639 = vpop.permute.xlu0 %1638
        %s1641 = sor.u32 256, 112
        %1642 = vbcast.lane.b32.xlu0 %v1584, %s1641
        %v1643 = vpop.permute.xlu0 %1642
        %s1645 = sor.u32 256, 120
        %1646 = vbcast.lane.b32.xlu0 %v1584, %s1645
        %v1647 = vpop.permute.xlu0 %1646
        %v1648 = vmul.f32 %v189, %v1386
        %v1649 = vmul.f32 %v190, %v1386
        %v1650 = vmul.f32 %v191, %v1390
        %v1651 = vmul.f32 %v192, %v1390
        %v1652 = vmul.f32 %v193, %v1394
        %v1653 = vmul.f32 %v194, %v1394
        %v1654 = vmul.f32 %v195, %v1398
        %v1655 = vmul.f32 %v196, %v1398
        %v1656 = vmul.f32 %v197, %v1402
        %v1657 = vmul.f32 %v198, %v1402
        %v1658 = vmul.f32 %v199, %v1406
        %v1659 = vmul.f32 %v200, %v1406
        %v1660 = vmul.f32 %v201, %v1410
        %v1661 = vmul.f32 %v202, %v1410
        %v1662 = vmul.f32 %v203, %v1414
        %v1663 = vmul.f32 %v204, %v1414
        %v1664 = vmul.f32 %v205, %v1418
        %v1665 = vmul.f32 %v206, %v1418
        %v1666 = vmul.f32 %v207, %v1422
        %v1667 = vmul.f32 %v208, %v1422
        %v1668 = vmul.f32 %v209, %v1426
        %v1669 = vmul.f32 %v210, %v1426
        %v1670 = vmul.f32 %v211, %v1430
        %v1671 = vmul.f32 %v212, %v1430
        %v1672 = vmul.f32 %v213, %v1434
        %v1673 = vmul.f32 %v214, %v1434
        %v1674 = vmul.f32 %v215, %v1438
        %v1675 = vmul.f32 %v216, %v1438
        %v1676 = vmul.f32 %v217, %v1442
        %v1677 = vmul.f32 %v218, %v1442
        %v1678 = vmul.f32 %v219, %v1446
        %v1679 = vmul.f32 %v220, %v1446
        %v1680 = vmul.f32 %v221, %v1453
        %v1681 = vmul.f32 %v222, %v1453
        %v1682 = vmul.f32 %v223, %v1457
        %v1683 = vmul.f32 %v224, %v1457
        %v1684 = vmul.f32 %v225, %v1461
        %v1685 = vmul.f32 %v226, %v1461
        %v1686 = vmul.f32 %v227, %v1465
        %v1687 = vmul.f32 %v228, %v1465
        %v1688 = vmul.f32 %v229, %v1469
        %v1689 = vmul.f32 %v230, %v1469
        %v1690 = vmul.f32 %v231, %v1473
        %v1691 = vmul.f32 %v232, %v1473
        %v1692 = vmul.f32 %v233, %v1477
        %v1693 = vmul.f32 %v234, %v1477
        %v1694 = vmul.f32 %v235, %v1481
        %v1695 = vmul.f32 %v236, %v1481
        %v1696 = vmul.f32 %v237, %v1485
        %v1697 = vmul.f32 %v238, %v1485
        %v1698 = vmul.f32 %v239, %v1489
        %v1699 = vmul.f32 %v240, %v1489
        %v1700 = vmul.f32 %v241, %v1493
        %v1701 = vmul.f32 %v242, %v1493
        %v1702 = vmul.f32 %v243, %v1497
        %v1703 = vmul.f32 %v244, %v1497
        %v1704 = vmul.f32 %v245, %v1501
        %v1705 = vmul.f32 %v246, %v1501
        %v1706 = vmul.f32 %v247, %v1505
        %v1707 = vmul.f32 %v248, %v1505
        %v1708 = vmul.f32 %v249, %v1509
        %v1709 = vmul.f32 %v250, %v1509
        %v1710 = vmul.f32 %v251, %v1513
        %v1711 = vmul.f32 %v252, %v1513
        %v1712 = vmul.f32 %v253, %v1520
        %v1713 = vmul.f32 %v254, %v1520
        %v1714 = vmul.f32 %v255, %v1524
        %v1715 = vmul.f32 %v256, %v1524
        %v1716 = vmul.f32 %v257, %v1528
        %v1717 = vmul.f32 %v258, %v1528
        %v1718 = vmul.f32 %v259, %v1532
        %v1719 = vmul.f32 %v260, %v1532
        %v1720 = vmul.f32 %v261, %v1536
        %v1721 = vmul.f32 %v262, %v1536
        %v1722 = vmul.f32 %v263, %v1540
        %v1723 = vmul.f32 %v264, %v1540
        %v1724 = vmul.f32 %v265, %v1544
        %v1725 = vmul.f32 %v266, %v1544
        %v1726 = vmul.f32 %v267, %v1548
        %v1727 = vmul.f32 %v268, %v1548
        %v1728 = vmul.f32 %v269, %v1552
        %v1729 = vmul.f32 %v270, %v1552
        %v1730 = vmul.f32 %v271, %v1556
        %v1731 = vmul.f32 %v272, %v1556
        %v1732 = vmul.f32 %v273, %v1560
        %v1733 = vmul.f32 %v274, %v1560
        %v1734 = vmul.f32 %v275, %v1564
        %v1735 = vmul.f32 %v276, %v1564
        %v1736 = vmul.f32 %v277, %v1568
        %v1737 = vmul.f32 %v278, %v1568
        %v1738 = vmul.f32 %v279, %v1572
        %v1739 = vmul.f32 %v280, %v1572
        %v1740 = vmul.f32 %v281, %v1576
        %v1741 = vmul.f32 %v282, %v1576
        %v1742 = vmul.f32 %v283, %v1580
        %v1743 = vmul.f32 %v284, %v1580
        %v1744 = vmul.f32 %v285, %v1587
        %v1745 = vmul.f32 %v286, %v1587
        %v1746 = vmul.f32 %v287, %v1591
        %v1747 = vmul.f32 %v288, %v1591
        %v1748 = vmul.f32 %v289, %v1595
        %v1749 = vmul.f32 %v290, %v1595
        %v1750 = vmul.f32 %v291, %v1599
        %v1751 = vmul.f32 %v292, %v1599
        %v1752 = vmul.f32 %v293, %v1603
        %v1753 = vmul.f32 %v294, %v1603
        %v1754 = vmul.f32 %v295, %v1607
        %v1755 = vmul.f32 %v296, %v1607
        %v1756 = vmul.f32 %v297, %v1611
        %v1757 = vmul.f32 %v298, %v1611
        %v1758 = vmul.f32 %v299, %v1615
        %v1759 = vmul.f32 %v300, %v1615
        %v1760 = vmul.f32 %v301, %v1619
        %v1761 = vmul.f32 %v302, %v1619
        %v1762 = vmul.f32 %v303, %v1623
        %v1763 = vmul.f32 %v304, %v1623
        %v1764 = vmul.f32 %v305, %v1627
        %v1765 = vmul.f32 %v306, %v1627
        %v1766 = vmul.f32 %v307, %v1631
        %v1767 = vmul.f32 %v308, %v1631
        %v1768 = vmul.f32 %v309, %v1635
        %v1769 = vmul.f32 %v310, %v1635
        %v1770 = vmul.f32 %v311, %v1639
        %v1771 = vmul.f32 %v312, %v1639
        %v1772 = vmul.f32 %v313, %v1643
        %v1773 = vmul.f32 %v314, %v1643
        %v1774 = vmul.f32 %v315, %v1647
        %v1775 = vmul.f32 %v316, %v1647
        %1776 = vst [vmem:[%s188] sm:$0xff] %v1648
        %1777 = vst [vmem:[%s188 + $0x8] sm:$0xff] %v1649
        %1778 = vst [vmem:[%s188 + $0x10] sm:$0xff] %v1650
        %1779 = vst [vmem:[%s188 + $0x18] sm:$0xff] %v1651
        %1780 = vst [vmem:[%s188 + $0x20] sm:$0xff] %v1652
        %1781 = vst [vmem:[%s188 + $0x28] sm:$0xff] %v1653
        %1782 = vst [vmem:[%s188 + $0x30] sm:$0xff] %v1654
        %1783 = vst [vmem:[%s188 + $0x38] sm:$0xff] %v1655
        %1784 = vst [vmem:[%s188 + $0x40] sm:$0xff] %v1656
        %1785 = vst [vmem:[%s188 + $0x48] sm:$0xff] %v1657
        %1786 = vst [vmem:[%s188 + $0x50] sm:$0xff] %v1658
        %1787 = vst [vmem:[%s188 + $0x58] sm:$0xff] %v1659
        %1788 = vst [vmem:[%s188 + $0x60] sm:$0xff] %v1660
        %1789 = vst [vmem:[%s188 + $0x68] sm:$0xff] %v1661
        %1790 = vst [vmem:[%s188 + $0x70] sm:$0xff] %v1662
        %1791 = vst [vmem:[%s188 + $0x78] sm:$0xff] %v1663
        %1792 = vst [vmem:[%s188 + $0x80] sm:$0xff] %v1664
        %1793 = vst [vmem:[%s188 + $0x88] sm:$0xff] %v1665
        %1794 = vst [vmem:[%s188 + $0x90] sm:$0xff] %v1666
        %1795 = vst [vmem:[%s188 + $0x98] sm:$0xff] %v1667
        %1796 = vst [vmem:[%s188 + $0xa0] sm:$0xff] %v1668
        %1797 = vst [vmem:[%s188 + $0xa8] sm:$0xff] %v1669
        %1798 = vst [vmem:[%s188 + $0xb0] sm:$0xff] %v1670
        %1799 = vst [vmem:[%s188 + $0xb8] sm:$0xff] %v1671
        %1800 = vst [vmem:[%s188 + $0xc0] sm:$0xff] %v1672
        %1801 = vst [vmem:[%s188 + $0xc8] sm:$0xff] %v1673
        %1802 = vst [vmem:[%s188 + $0xd0] sm:$0xff] %v1674
        %1803 = vst [vmem:[%s188 + $0xd8] sm:$0xff] %v1675
        %1804 = vst [vmem:[%s188 + $0xe0] sm:$0xff] %v1676
        %1805 = vst [vmem:[%s188 + $0xe8] sm:$0xff] %v1677
        %1806 = vst [vmem:[%s188 + $0xf0] sm:$0xff] %v1678
        %1807 = vst [vmem:[%s188 + $0xf8] sm:$0xff] %v1679
        %1808 = vst [vmem:[%s188 + $0x100] sm:$0xff] %v1680
        %1809 = vst [vmem:[%s188 + $0x108] sm:$0xff] %v1681
        %1810 = vst [vmem:[%s188 + $0x110] sm:$0xff] %v1682
        %1811 = vst [vmem:[%s188 + $0x118] sm:$0xff] %v1683
        %1812 = vst [vmem:[%s188 + $0x120] sm:$0xff] %v1684
        %1813 = vst [vmem:[%s188 + $0x128] sm:$0xff] %v1685
        %1814 = vst [vmem:[%s188 + $0x130] sm:$0xff] %v1686
        %1815 = vst [vmem:[%s188 + $0x138] sm:$0xff] %v1687
        %1816 = vst [vmem:[%s188 + $0x140] sm:$0xff] %v1688
        %1817 = vst [vmem:[%s188 + $0x148] sm:$0xff] %v1689
        %1818 = vst [vmem:[%s188 + $0x150] sm:$0xff] %v1690
        %1819 = vst [vmem:[%s188 + $0x158] sm:$0xff] %v1691
        %1820 = vst [vmem:[%s188 + $0x160] sm:$0xff] %v1692
        %1821 = vst [vmem:[%s188 + $0x168] sm:$0xff] %v1693
        %1822 = vst [vmem:[%s188 + $0x170] sm:$0xff] %v1694
        %1823 = vst [vmem:[%s188 + $0x178] sm:$0xff] %v1695
        %1824 = vst [vmem:[%s188 + $0x180] sm:$0xff] %v1696
        %1825 = vst [vmem:[%s188 + $0x188] sm:$0xff] %v1697
        %1826 = vst [vmem:[%s188 + $0x190] sm:$0xff] %v1698
        %1827 = vst [vmem:[%s188 + $0x198] sm:$0xff] %v1699
        %1828 = vst [vmem:[%s188 + $0x1a0] sm:$0xff] %v1700
        %1829 = vst [vmem:[%s188 + $0x1a8] sm:$0xff] %v1701
        %1830 = vst [vmem:[%s188 + $0x1b0] sm:$0xff] %v1702
        %1831 = vst [vmem:[%s188 + $0x1b8] sm:$0xff] %v1703
        %1832 = vst [vmem:[%s188 + $0x1c0] sm:$0xff] %v1704
        %1833 = vst [vmem:[%s188 + $0x1c8] sm:$0xff] %v1705
        %1834 = vst [vmem:[%s188 + $0x1d0] sm:$0xff] %v1706
        %1835 = vst [vmem:[%s188 + $0x1d8] sm:$0xff] %v1707
        %1836 = vst [vmem:[%s188 + $0x1e0] sm:$0xff] %v1708
        %1837 = vst [vmem:[%s188 + $0x1e8] sm:$0xff] %v1709
        %1838 = vst [vmem:[%s188 + $0x1f0] sm:$0xff] %v1710
        %1839 = vst [vmem:[%s188 + $0x1f8] sm:$0xff] %v1711
        %1840 = vst [vmem:[%s188 + $0x200] sm:$0xff] %v1712
        %1841 = vst [vmem:[%s188 + $0x208] sm:$0xff] %v1713
        %1842 = vst [vmem:[%s188 + $0x210] sm:$0xff] %v1714
        %1843 = vst [vmem:[%s188 + $0x218] sm:$0xff] %v1715
        %1844 = vst [vmem:[%s188 + $0x220] sm:$0xff] %v1716
        %1845 = vst [vmem:[%s188 + $0x228] sm:$0xff] %v1717
        %1846 = vst [vmem:[%s188 + $0x230] sm:$0xff] %v1718
        %1847 = vst [vmem:[%s188 + $0x238] sm:$0xff] %v1719
        %1848 = vst [vmem:[%s188 + $0x240] sm:$0xff] %v1720
        %1849 = vst [vmem:[%s188 + $0x248] sm:$0xff] %v1721
        %1850 = vst [vmem:[%s188 + $0x250] sm:$0xff] %v1722
        %1851 = vst [vmem:[%s188 + $0x258] sm:$0xff] %v1723
        %1852 = vst [vmem:[%s188 + $0x260] sm:$0xff] %v1724
        %1853 = vst [vmem:[%s188 + $0x268] sm:$0xff] %v1725
        %1854 = vst [vmem:[%s188 + $0x270] sm:$0xff] %v1726
        %1855 = vst [vmem:[%s188 + $0x278] sm:$0xff] %v1727
        %1856 = vst [vmem:[%s188 + $0x280] sm:$0xff] %v1728
        %1857 = vst [vmem:[%s188 + $0x288] sm:$0xff] %v1729
        %1858 = vst [vmem:[%s188 + $0x290] sm:$0xff] %v1730
        %1859 = vst [vmem:[%s188 + $0x298] sm:$0xff] %v1731
        %1860 = vst [vmem:[%s188 + $0x2a0] sm:$0xff] %v1732
        %1861 = vst [vmem:[%s188 + $0x2a8] sm:$0xff] %v1733
        %1862 = vst [vmem:[%s188 + $0x2b0] sm:$0xff] %v1734
        %1863 = vst [vmem:[%s188 + $0x2b8] sm:$0xff] %v1735
        %1864 = vst [vmem:[%s188 + $0x2c0] sm:$0xff] %v1736
        %1865 = vst [vmem:[%s188 + $0x2c8] sm:$0xff] %v1737
        %1866 = vst [vmem:[%s188 + $0x2d0] sm:$0xff] %v1738
        %1867 = vst [vmem:[%s188 + $0x2d8] sm:$0xff] %v1739
        %1868 = vst [vmem:[%s188 + $0x2e0] sm:$0xff] %v1740
        %1869 = vst [vmem:[%s188 + $0x2e8] sm:$0xff] %v1741
        %1870 = vst [vmem:[%s188 + $0x2f0] sm:$0xff] %v1742
        %1871 = vst [vmem:[%s188 + $0x2f8] sm:$0xff] %v1743
        %1872 = vst [vmem:[%s188 + $0x300] sm:$0xff] %v1744
        %1873 = vst [vmem:[%s188 + $0x308] sm:$0xff] %v1745
        %1874 = vst [vmem:[%s188 + $0x310] sm:$0xff] %v1746
        %1875 = vst [vmem:[%s188 + $0x318] sm:$0xff] %v1747
        %1876 = vst [vmem:[%s188 + $0x320] sm:$0xff] %v1748
        %1877 = vst [vmem:[%s188 + $0x328] sm:$0xff] %v1749
        %1878 = vst [vmem:[%s188 + $0x330] sm:$0xff] %v1750
        %1879 = vst [vmem:[%s188 + $0x338] sm:$0xff] %v1751
        %1880 = vst [vmem:[%s188 + $0x340] sm:$0xff] %v1752
        %1881 = vst [vmem:[%s188 + $0x348] sm:$0xff] %v1753
        %1882 = vst [vmem:[%s188 + $0x350] sm:$0xff] %v1754
        %1883 = vst [vmem:[%s188 + $0x358] sm:$0xff] %v1755
        %1884 = vst [vmem:[%s188 + $0x360] sm:$0xff] %v1756
        %1885 = vst [vmem:[%s188 + $0x368] sm:$0xff] %v1757
        %1886 = vst [vmem:[%s188 + $0x370] sm:$0xff] %v1758
        %1887 = vst [vmem:[%s188 + $0x378] sm:$0xff] %v1759
        %1888 = vst [vmem:[%s188 + $0x380] sm:$0xff] %v1760
        %1889 = vst [vmem:[%s188 + $0x388] sm:$0xff] %v1761
        %1890 = vst [vmem:[%s188 + $0x390] sm:$0xff] %v1762
        %1891 = vst [vmem:[%s188 + $0x398] sm:$0xff] %v1763
        %1892 = vst [vmem:[%s188 + $0x3a0] sm:$0xff] %v1764
        %1893 = vst [vmem:[%s188 + $0x3a8] sm:$0xff] %v1765
        %1894 = vst [vmem:[%s188 + $0x3b0] sm:$0xff] %v1766
        %1895 = vst [vmem:[%s188 + $0x3b8] sm:$0xff] %v1767
        %1896 = vst [vmem:[%s188 + $0x3c0] sm:$0xff] %v1768
        %1897 = vst [vmem:[%s188 + $0x3c8] sm:$0xff] %v1769
        %1898 = vst [vmem:[%s188 + $0x3d0] sm:$0xff] %v1770
        %1899 = vst [vmem:[%s188 + $0x3d8] sm:$0xff] %v1771
        %1900 = vst [vmem:[%s188 + $0x3e0] sm:$0xff] %v1772
        %1901 = vst [vmem:[%s188 + $0x3e8] sm:$0xff] %v1773
        %1902 = vst [vmem:[%s188 + $0x3f0] sm:$0xff] %v1774
        %1903 = vst [vmem:[%s188 + $0x3f8] sm:$0xff] %v1775
        %s1904 = sand.u32 %s96, 1
        %s1905 = scalar_lea.sflag [#allocation4], %s1904
        %s1906 = sand.u32 %s96, 1
        %s1907 = smul.addr %s1906, 1024
        %s1908 = scalar_lea.vmem [#allocation5], %s1907
        // Predicated region
        $region37: #{tpu_custom_call.1} parent=31 // pred_check
          %p1909 = pneg %p106
        $region38: #{tpu_custom_call.1} parent=31 // pred_check_branch
          %1911 = sbr.rel (%p1909) target = $region40
        $region39: #{tpu_custom_call.1} parent=31 // pred_region
          %s1913 = ssub.s32 16384, 16384
          %1914 = vsyncadd %s1905, %s1913
          %s1915 = smul.addr %s20, 128
          %s1916 = smul.addr %s1915, 128
          %s1917 = scalar_lea.hbm %s3, %s1916
          %s1918 = sshll.u32 %s1908, 4
          %s1919 = int_to_ptr.vmem [resolvable:$true] %s1918
          %1924 = dma.vmem_to_hbm [thread:$0]  %s1919, 16384, %s1917, %s1905, 256, 256, 16
        $region40: #{tpu_custom_call.1} parent=31 // pred_fallthru
          _
      $region32: #{tpu_custom_call.1} parent=5 // pred_fallthru
        _
      %p1925 = scmp.le.s32.totalorder 2, %s15
      // Predicated region
      $region41: #{tpu_custom_call.1} parent=5 // pred_check
        %p1926 = pneg %p1925
      $region42: #{tpu_custom_call.1} parent=5 // pred_check_branch
        %1928 = sbr.rel (%p1926) target = $region44
      $region43: #{tpu_custom_call.1} parent=5 // pred_region
        %s1929 = ssub.s32 %s15, 2
        // Predicated region
        $region45: #{tpu_custom_call.1} parent=43 // pred_check
          %p1930 = pneg %p112
        $region46: #{tpu_custom_call.1} parent=43 // pred_check_branch
          %1932 = sbr.rel (%p1930) target = $region48
        $region47: #{tpu_custom_call.1} parent=43 // pred_region
          %s1933 = sand.u32 %s97, 1
          %s1934 = scalar_lea.sflag [#allocation4], %s1933
          %s1935 = sand.u32 %s97, 1
          %s1936 = smul.addr %s1935, 1024
          %s1937 = scalar_lea.vmem [#allocation5], %s1936
          %1938 = dma.done %s1934, 16384
        $region48: #{tpu_custom_call.1} parent=43 // pred_fallthru
          _
      $region44: #{tpu_custom_call.1} parent=5 // pred_fallthru
        _
    $region6: #{tpu_custom_call.1} parent=1 // loop_footer
      %s19 = sadd.s32 1, %s15
    $region7: #{tpu_custom_call.1} parent=1 // loop_footer_branch
      %14 = sbr.rel target = $region3
    $region8: #{tpu_custom_call.1} parent=1 // loop_exit
      _
    %1939 = vsyncpa [#allocation3], 1
    %s1940 = scalar_lea.sflag [#allocation3], 1
    %1941 = vsyncpa %s1940, 1
    %1942 = vsyncpa [#allocation4], 1
    %s1943 = scalar_lea.sflag [#allocation4], 1
    %1944 = vsyncpa %s1943, 1

</llo_original>
